<compile_context>
chip_gen: v7x
topology: tpu7x:2x2x1
jax: 0.10.0
libtpu: 0.0.40
codegen_flags: <defaults>
</compile_context>

<pallas_src>
import functools

import jax
import jax.numpy as jnp
from jax.experimental import pallas as pl
from jax.experimental.pallas import tpu as pltpu

H = 32            # hidden_size
R = 32            # retriever_dim (== hidden_size, mirroring the reference defaults)
TOPK = 16         # max_knowledge_items (top-k retrieved items)
LN_EPS = 1e-5     # torch LayerNorm default eps
NEG = -1e30       # masked-score fill (exp underflows to exactly 0 in f32)
MAX_ROW_TILE = 1024

# Row indices of the packed per-feature vector table (biases / LN gammas / betas).
(I_BQ, I_GQ, I_BETQ,
 I_BR1, I_GR1, I_BETR1, I_BR2,
 I_BF1, I_GF1, I_BETF1, I_BF2,
 I_BO, I_GLN, I_BLN) = range(14)
NUM_VECS = 14


def _round_up(n, m):
    return (n + m - 1) // m * m


# ----------------------------- math helpers (jnp-only) -----------------------------

def _erf(x):
    # Abramowitz & Stegun 7.1.26 (|err| <= 1.5e-7): erf-exact GELU stand-in using
    # only primitives guaranteed to lower on Mosaic (exp / abs / where).
    a1, a2, a3, a4, a5 = 0.254829592, -0.284496736, 1.421413741, -1.453152027, 1.061405429
    p = 0.3275911
    ax = jnp.abs(x)
    t = 1.0 / (1.0 + p * ax)
    poly = ((((a5 * t + a4) * t + a3) * t + a2) * t + a1) * t
    y = 1.0 - poly * jnp.exp(-ax * ax)
    return jnp.where(x >= 0.0, y, -y)


def _gelu(x):
    # PyTorch nn.GELU() default (erf-exact form).
    return 0.5 * x * (1.0 + _erf(x * 0.7071067811865476))


def _layer_norm(x, gamma, beta):
    mu = jnp.mean(x, axis=-1, keepdims=True)
    var = jnp.mean((x - mu) ** 2, axis=-1, keepdims=True)
    return (x - mu) * jax.lax.rsqrt(var + LN_EPS) * gamma + beta


def _fast_recip(x):
    # EUP approximate reciprocal + one Newton step (~f32-exact), keeping the
    # divide off the VALU slot.
    r = pl.reciprocal(x, approx=True)
    return r * (2.0 - x * r)


# --------------------------------- fused kernel -----------------------------------

def rag_kernel(x_ref, kenc_ref, wx_ref, wr2_ref, wrv_ref, wf2_ref, vecs_ref,
               out_ref, ts_ref, *, topk):
    x = x_ref[...]                         # [TM, H]
    k_enc = kenc_ref[...]                  # [K, R]  (precomputed knowledge encoder)
    vecs = vecs_ref[...]                   # [NUM_VECS, 32]

    def v(i):                              # one packed bias / gamma / beta row
        return vecs[i:i + 1, :]

    # ---- query encoder + rule retriever + fusion-gate first half (stacked matmul) ----
    xw = jnp.dot(x, wx_ref[...], preferred_element_type=jnp.float32)   # [TM, 3R]
    q = _layer_norm(xw[:, 0:R] + v(I_BQ), v(I_GQ), v(I_BETQ))
    rh = _gelu(_layer_norm(xw[:, R:2 * R] + v(I_BR1), v(I_GR1), v(I_BETR1)))
    r = jnp.dot(rh, wr2_ref[...], preferred_element_type=jnp.float32) + v(I_BR2)
    qs = q + r                                                          # query_states
    f1a = xw[:, 2 * R:3 * R]               # hidden-half of fusion_gate first Linear

    # ---- retrieval scores (contract feature axis; no transpose of k_enc needed) ----
    s = jax.lax.dot_general(
        qs, k_enc, dimension_numbers=(((1,), (1,)), ((), ())),
        preferred_element_type=jnp.float32)                              # [TM, K]

    # ---- in-kernel top-k: `topk` unrolled max + first-occurrence-mask passes ----
    tm, kk = s.shape
    col = jax.lax.broadcasted_iota(jnp.int32, (tm, kk), 1)
    tcol = jax.lax.broadcasted_iota(jnp.int32, (tm, topk), 1)
    work = s
    sel = jnp.zeros((tm, kk), jnp.float32)       # 1.0 where entry was selected
    ts = jnp.zeros((tm, topk), jnp.float32)      # top-k scores, descending order
    for t in range(topk):
        m = jnp.max(work, axis=-1, keepdims=True)
        is_max = work == m
        first = jnp.min(jnp.where(is_max, col, kk), axis=-1, keepdims=True)
        hit = col == first                        # first occurrence only (torch.topk parity)
        sel = jnp.where(hit, 1.0, sel)
        work = jnp.where(hit, NEG, work)
        ts = jnp.where(tcol == t, m, ts)
    ts_ref[...] = ts

    # ---- masked softmax over K == softmax over the top-k, then retrieve via MXU ----
    masked = jnp.where(sel > 0.0, s, NEG)
    mm = jnp.max(masked, axis=-1, keepdims=True)
    e = jnp.exp(masked - mm)
    probs = e * _fast_recip(jnp.sum(e, axis=-1, keepdims=True))
    retrieved = jnp.dot(probs, k_enc, preferred_element_type=jnp.float32)   # [TM, R]

    # ---- fusion gate second half + output projection (stacked matmul on retrieved) ----
    rw = jnp.dot(retrieved, wrv_ref[...], preferred_element_type=jnp.float32)  # [TM, 2H]
    f1b = rw[:, 0:H]
    out_lin = rw[:, H:2 * H] + v(I_BO)

    h1 = _gelu(_layer_norm(f1a + f1b + v(I_BF1), v(I_GF1), v(I_BETF1)))
    fw = jax.nn.sigmoid(
        jnp.dot(h1, wf2_ref[...], preferred_element_type=jnp.float32) + v(I_BF2))
    out = x * (1.0 - fw) + out_lin * fw
    out_ref[...] = _layer_norm(out, v(I_GLN), v(I_BLN))
    # (dropout: eval mode -> identity)


# ------------------------------ pallas wrapper helpers ------------------------------

def _full(shape):
    n = len(shape)
    return pl.BlockSpec(shape, lambda i: (0,) * n)


# ------------------------------------ parameters ------------------------------------

def init_params(key):
    ks = jax.random.split(key, 16)
    nrm = lambda k, s: 0.02 * jax.random.normal(k, s, jnp.float32)
    ones = lambda s: jnp.ones(s, jnp.float32)
    zeros = lambda s: jnp.zeros(s, jnp.float32)

    # individual torch-equivalent parameters
    wq, wr1, wf1a = nrm(ks[0], (H, R)), nrm(ks[1], (H, R)), nrm(ks[2], (H, H))
    wr2 = nrm(ks[3], (R, R))
    wf1b, wo = nrm(ks[4], (R, H)), nrm(ks[5], (R, H))
    wf2 = nrm(ks[6], (H, H))
    wk = nrm(ks[7], (R, R))
    bq, br1, br2 = nrm(ks[8], (1, R)), nrm(ks[9], (1, R)), nrm(ks[10], (1, R))
    bf1, bf2, bo = nrm(ks[11], (1, H)), nrm(ks[12], (1, H)), nrm(ks[13], (1, H))
    bk = nrm(ks[14], (1, R))

    vec_rows = [None] * NUM_VECS
    vec_rows[I_BQ], vec_rows[I_GQ], vec_rows[I_BETQ] = bq, ones((1, R)), zeros((1, R))
    vec_rows[I_BR1], vec_rows[I_GR1], vec_rows[I_BETR1] = br1, ones((1, R)), zeros((1, R))
    vec_rows[I_BR2] = br2
    vec_rows[I_BF1], vec_rows[I_GF1], vec_rows[I_BETF1] = bf1, ones((1, H)), zeros((1, H))
    vec_rows[I_BF2] = bf2
    vec_rows[I_BO] = bo
    vec_rows[I_GLN], vec_rows[I_BLN] = ones((1, H)), zeros((1, H))

    return {
        # knowledge encoder (computed once in XLA, row-count independent)
        "wk": wk, "bk": bk, "gk": ones((1, R)), "betk": zeros((1, R)),
        # stacked x-consumers: [wq | wr1 | wf1a]  -> [H, 3R]
        "wx": jnp.concatenate([wq, wr1, wf1a], axis=1),
        "wr2": wr2,
        # stacked retrieved-consumers: [wf1b | wo] -> [R, 2H]
        "wrv": jnp.concatenate([wf1b, wo], axis=1),
        "wf2": wf2,
        # packed biases / LN gammas / betas -> [14, 32]
        "vecs": jnp.concatenate(vec_rows, axis=0),
    }


# -------------------------------------- forward --------------------------------------

def enhanced_rag_forward(hidden_states, knowledge_bank, params):
    B, S, _ = hidden_states.shape
    K = knowledge_bank.shape[0]
    topk = min(TOPK, K)
    N = B * S
    x = hidden_states.reshape(N, H).astype(jnp.float32)
    kb = knowledge_bank.astype(jnp.float32)

    # knowledge_encoders['knowledge'] (Linear(R,R) + LayerNorm): independent of the
    # token rows -> computed once in XLA and fed to the kernel as a resident block.
    k_enc = _layer_norm(
        jnp.dot(kb, params["wk"], preferred_element_type=jnp.float32) + params["bk"],
        params["gk"], params["betk"])

    # Row tiling: large tiles to amortize per-step overhead, but keep >= 2 grid
    # steps so both v7x TensorCores get work under dimension_semantics=("parallel",).
    tm = min(MAX_ROW_TILE, max(8, _round_up(pl.cdiv(N, 2), 8)))
    n_pad = _round_up(N, tm)
    if n_pad != N:
        x = jnp.pad(x, ((0, n_pad - N), (0, 0)))

    # TODO(synk): FAISS approximate search has no TPU equivalent; dense matmul + top-k path used.
    # TODO(synk): _route_to_memory / memory_update_gate only mutate nn.Parameters in-place
    #             (no contribution to the returned tensors) -> removed from forward.
    # TODO(synk): _compose_knowledge disabled — reference multiplies [B,S,T,1] softmax weights
    #             against [B,S,T+T//2,H] composed items (shape error for T>=2).
    # TODO(synk): _verify_retrieved_knowledge is not defined in the reference source.
    consts = (k_enc, params["wx"], params["wr2"], params["wrv"], params["wf2"], params["vecs"])
    out_pad, ts_pad = pl.pallas_call(
        functools.partial(rag_kernel, topk=topk),
        out_shape=(jax.ShapeDtypeStruct((n_pad, H), jnp.float32),
                   jax.ShapeDtypeStruct((n_pad, topk), jnp.float32)),
        grid=(n_pad // tm,),
        in_specs=[pl.BlockSpec((tm, H), lambda i: (i, 0))]
                 + [_full(a.shape) for a in consts],
        out_specs=(pl.BlockSpec((tm, H), lambda i: (i, 0)),
                   pl.BlockSpec((tm, topk), lambda i: (i, 0))),
        compiler_params=pltpu.CompilerParams(dimension_semantics=("parallel",)),
    )(x, *consts)

    top_scores = ts_pad[:N]
    # knowledge_weights = softmax(top-k scores): 16-lane op kept in XLA so the kernel
    # only emits lane-efficient outputs.
    kw = jax.nn.softmax(top_scores, axis=-1)
    return {
        "hidden_states": out_pad[:N].reshape(B, S, H),        # dropout: eval -> identity
        "retrieval_scores": top_scores.reshape(B, S, topk),
        "knowledge_weights": kw.reshape(B, S, topk),
    }


if __name__ == "__main__":
    key = jax.random.PRNGKey(0)
    k_x, k_kb, k_p = jax.random.split(key, 3)
    B, S, K = 2, 8, 64
    hidden_states = jax.random.normal(k_x, (B, S, H), jnp.float32)
    knowledge_bank = jax.random.normal(k_kb, (K, R), jnp.float32)
    params = init_params(k_p)

    fwd = jax.jit(enhanced_rag_forward)
    outs = fwd(hidden_states, knowledge_bank, params)
    jax.block_until_ready(outs)

    assert outs["hidden_states"].shape == (B, S, H)
    assert outs["retrieval_scores"].shape == (B, S, TOPK)
    assert outs["knowledge_weights"].shape == (B, S, TOPK)
    assert bool(jnp.all(jnp.isfinite(outs["hidden_states"])))
    assert bool(jnp.all(jnp.isfinite(outs["retrieval_scores"])))
    assert bool(jnp.all(jnp.isfinite(outs["knowledge_weights"])))
    print("KERNEL_OK")
</pallas_src>

<mosaic_0001>
module attributes {stable_mosaic.version = 11 : i64} {
  func.func @rag_kernel(%arg0: i32, %arg1: memref<8x32xf32, #tpu.memory_space<vmem>>, %arg2: memref<64x32xf32, #tpu.memory_space<vmem>>, %arg3: memref<32x96xf32, #tpu.memory_space<vmem>>, %arg4: memref<32x32xf32, #tpu.memory_space<vmem>>, %arg5: memref<32x64xf32, #tpu.memory_space<vmem>>, %arg6: memref<32x32xf32, #tpu.memory_space<vmem>>, %arg7: memref<14x32xf32, #tpu.memory_space<vmem>>, %arg8: memref<8x32xf32, #tpu.memory_space<vmem>>, %arg9: memref<8x16xf32, #tpu.memory_space<vmem>>) attributes {dimension_semantics = [#tpu.dimension_semantics<parallel>], iteration_bounds = array<i64: 2>, scalar_prefetch = 0 : i64, scratch_operands = 0 : i64, tpu.core_type = #tpu.core_type<tc>, window_params = [{transform_indices = @transform_0, window_bounds = array<i64: 8, 32>}, {pipeline_mode = #tpu.pipeline_mode<synchronous>, transform_indices = @transform_1, window_bounds = array<i64: 64, 32>}, {pipeline_mode = #tpu.pipeline_mode<synchronous>, transform_indices = @transform_2, window_bounds = array<i64: 32, 96>}, {pipeline_mode = #tpu.pipeline_mode<synchronous>, transform_indices = @transform_3, window_bounds = array<i64: 32, 32>}, {pipeline_mode = #tpu.pipeline_mode<synchronous>, transform_indices = @transform_4, window_bounds = array<i64: 32, 64>}, {pipeline_mode = #tpu.pipeline_mode<synchronous>, transform_indices = @transform_5, window_bounds = array<i64: 32, 32>}, {pipeline_mode = #tpu.pipeline_mode<synchronous>, transform_indices = @transform_6, window_bounds = array<i64: 14, 32>}, {transform_indices = @transform_7, window_bounds = array<i64: 8, 32>}, {transform_indices = @transform_8, window_bounds = array<i64: 8, 16>}]} {
    %c0 = arith.constant 0 : index
    %c0_0 = arith.constant 0 : index
    %0 = vector.load %arg1[%c0, %c0_0] : memref<8x32xf32, #tpu.memory_space<vmem>>, vector<8x32xf32>
    %c0_1 = arith.constant 0 : index
    %c0_2 = arith.constant 0 : index
    %1 = vector.load %arg2[%c0_1, %c0_2] : memref<64x32xf32, #tpu.memory_space<vmem>>, vector<64x32xf32>
    %c0_3 = arith.constant 0 : index
    %c0_4 = arith.constant 0 : index
    %2 = vector.load %arg7[%c0_3, %c0_4] : memref<14x32xf32, #tpu.memory_space<vmem>>, vector<14x32xf32>
    %c0_5 = arith.constant 0 : index
    %c0_6 = arith.constant 0 : index
    %3 = vector.load %arg3[%c0_5, %c0_6] : memref<32x96xf32, #tpu.memory_space<vmem>>, vector<32x96xf32>
    %cst = arith.constant dense<0.000000e+00> : vector<8x96xf32>
    %4 = tpu.matmul %0, %3, %cst {dimension_numbers = #tpu.dot_dimension_numbers<[1], [0], [0], [1], [0, 0, 1, 1], [], []>} : vector<8x32xf32>, vector<32x96xf32>, vector<8x96xf32> -> vector<8x96xf32>
    %5 = vector.extract_strided_slice %4 {offsets = [0, 0], sizes = [8, 32], strides = [1, 1]} : vector<8x96xf32> to vector<8x32xf32>
    %6 = vector.extract_strided_slice %2 {offsets = [0, 0], sizes = [1, 32], strides = [1, 1]} : vector<14x32xf32> to vector<1x32xf32>
    %7 = vector.broadcast %6 : vector<1x32xf32> to vector<8x32xf32>
    %8 = arith.addf %5, %7 : vector<8x32xf32>
    %9 = vector.extract_strided_slice %2 {offsets = [1, 0], sizes = [1, 32], strides = [1, 1]} : vector<14x32xf32> to vector<1x32xf32>
    %10 = vector.extract_strided_slice %2 {offsets = [2, 0], sizes = [1, 32], strides = [1, 1]} : vector<14x32xf32> to vector<1x32xf32>
    %cst_7 = arith.constant dense<0.000000e+00> : vector<8xf32>
    %11 = vector.multi_reduction <add>, %8, %cst_7 [1] : vector<8x32xf32> to vector<8xf32>
    %12 = vector.shape_cast %11 : vector<8xf32> to vector<8x1xf32>
    %cst_8 = arith.constant 3.200000e+01 : f32
    %13 = vector.broadcast %cst_8 : f32 to vector<8x1xf32>
    %14 = arith.divf %12, %13 : vector<8x1xf32>
    %15 = vector.broadcast %14 : vector<8x1xf32> to vector<8x32xf32>
    %16 = arith.subf %8, %15 : vector<8x32xf32>
    %17 = arith.mulf %16, %16 : vector<8x32xf32>
    %cst_9 = arith.constant dense<0.000000e+00> : vector<8xf32>
    %18 = vector.multi_reduction <add>, %17, %cst_9 [1] : vector<8x32xf32> to vector<8xf32>
    %19 = vector.shape_cast %18 : vector<8xf32> to vector<8x1xf32>
    %cst_10 = arith.constant 3.200000e+01 : f32
    %20 = vector.broadcast %cst_10 : f32 to vector<8x1xf32>
    %21 = arith.divf %19, %20 : vector<8x1xf32>
    %22 = vector.broadcast %14 : vector<8x1xf32> to vector<8x32xf32>
    %23 = arith.subf %8, %22 : vector<8x32xf32>
    %cst_11 = arith.constant 9.99999974E-6 : f32
    %24 = vector.broadcast %cst_11 : f32 to vector<8x1xf32>
    %25 = arith.addf %21, %24 : vector<8x1xf32>
    %26 = math.rsqrt %25 : vector<8x1xf32>
    %27 = vector.broadcast %26 : vector<8x1xf32> to vector<8x32xf32>
    %28 = arith.mulf %23, %27 : vector<8x32xf32>
    %29 = vector.broadcast %9 : vector<1x32xf32> to vector<8x32xf32>
    %30 = arith.mulf %28, %29 : vector<8x32xf32>
    %31 = vector.broadcast %10 : vector<1x32xf32> to vector<8x32xf32>
    %32 = arith.addf %30, %31 : vector<8x32xf32>
    %33 = vector.extract_strided_slice %4 {offsets = [0, 32], sizes = [8, 32], strides = [1, 1]} : vector<8x96xf32> to vector<8x32xf32>
    %34 = vector.extract_strided_slice %2 {offsets = [3, 0], sizes = [1, 32], strides = [1, 1]} : vector<14x32xf32> to vector<1x32xf32>
    %35 = vector.broadcast %34 : vector<1x32xf32> to vector<8x32xf32>
    %36 = arith.addf %33, %35 : vector<8x32xf32>
    %37 = vector.extract_strided_slice %2 {offsets = [4, 0], sizes = [1, 32], strides = [1, 1]} : vector<14x32xf32> to vector<1x32xf32>
    %38 = vector.extract_strided_slice %2 {offsets = [5, 0], sizes = [1, 32], strides = [1, 1]} : vector<14x32xf32> to vector<1x32xf32>
    %cst_12 = arith.constant dense<0.000000e+00> : vector<8xf32>
    %39 = vector.multi_reduction <add>, %36, %cst_12 [1] : vector<8x32xf32> to vector<8xf32>
    %40 = vector.shape_cast %39 : vector<8xf32> to vector<8x1xf32>
    %cst_13 = arith.constant 3.200000e+01 : f32
    %41 = vector.broadcast %cst_13 : f32 to vector<8x1xf32>
    %42 = arith.divf %40, %41 : vector<8x1xf32>
    %43 = vector.broadcast %42 : vector<8x1xf32> to vector<8x32xf32>
    %44 = arith.subf %36, %43 : vector<8x32xf32>
    %45 = arith.mulf %44, %44 : vector<8x32xf32>
    %cst_14 = arith.constant dense<0.000000e+00> : vector<8xf32>
    %46 = vector.multi_reduction <add>, %45, %cst_14 [1] : vector<8x32xf32> to vector<8xf32>
    %47 = vector.shape_cast %46 : vector<8xf32> to vector<8x1xf32>
    %cst_15 = arith.constant 3.200000e+01 : f32
    %48 = vector.broadcast %cst_15 : f32 to vector<8x1xf32>
    %49 = arith.divf %47, %48 : vector<8x1xf32>
    %50 = vector.broadcast %42 : vector<8x1xf32> to vector<8x32xf32>
    %51 = arith.subf %36, %50 : vector<8x32xf32>
    %cst_16 = arith.constant 9.99999974E-6 : f32
    %52 = vector.broadcast %cst_16 : f32 to vector<8x1xf32>
    %53 = arith.addf %49, %52 : vector<8x1xf32>
    %54 = math.rsqrt %53 : vector<8x1xf32>
    %55 = vector.broadcast %54 : vector<8x1xf32> to vector<8x32xf32>
    %56 = arith.mulf %51, %55 : vector<8x32xf32>
    %57 = vector.broadcast %37 : vector<1x32xf32> to vector<8x32xf32>
    %58 = arith.mulf %56, %57 : vector<8x32xf32>
    %59 = vector.broadcast %38 : vector<1x32xf32> to vector<8x32xf32>
    %60 = arith.addf %58, %59 : vector<8x32xf32>
    %cst_17 = arith.constant 5.000000e-01 : f32
    %61 = vector.broadcast %cst_17 : f32 to vector<8x32xf32>
    %62 = arith.mulf %61, %60 : vector<8x32xf32>
    %cst_18 = arith.constant 0.707106769 : f32
    %63 = vector.broadcast %cst_18 : f32 to vector<8x32xf32>
    %64 = arith.mulf %60, %63 : vector<8x32xf32>
    %65 = math.absf %64 : vector<8x32xf32>
    %cst_19 = arith.constant 0.327591091 : f32
    %66 = vector.broadcast %cst_19 : f32 to vector<8x32xf32>
    %67 = arith.mulf %66, %65 : vector<8x32xf32>
    %cst_20 = arith.constant 1.000000e+00 : f32
    %68 = vector.broadcast %cst_20 : f32 to vector<8x32xf32>
    %69 = arith.addf %68, %67 : vector<8x32xf32>
    %cst_21 = arith.constant 1.000000e+00 : f32
    %70 = vector.broadcast %cst_21 : f32 to vector<8x32xf32>
    %71 = arith.divf %70, %69 : vector<8x32xf32>
    %cst_22 = arith.constant 1.06140542 : f32
    %72 = vector.broadcast %cst_22 : f32 to vector<8x32xf32>
    %73 = arith.mulf %72, %71 : vector<8x32xf32>
    %cst_23 = arith.constant -1.45315206 : f32
    %74 = vector.broadcast %cst_23 : f32 to vector<8x32xf32>
    %75 = arith.addf %73, %74 : vector<8x32xf32>
    %76 = arith.mulf %75, %71 : vector<8x32xf32>
    %cst_24 = arith.constant 1.42141378 : f32
    %77 = vector.broadcast %cst_24 : f32 to vector<8x32xf32>
    %78 = arith.addf %76, %77 : vector<8x32xf32>
    %79 = arith.mulf %78, %71 : vector<8x32xf32>
    %cst_25 = arith.constant -0.284496725 : f32
    %80 = vector.broadcast %cst_25 : f32 to vector<8x32xf32>
    %81 = arith.addf %79, %80 : vector<8x32xf32>
    %82 = arith.mulf %81, %71 : vector<8x32xf32>
    %cst_26 = arith.constant 0.254829586 : f32
    %83 = vector.broadcast %cst_26 : f32 to vector<8x32xf32>
    %84 = arith.addf %82, %83 : vector<8x32xf32>
    %85 = arith.mulf %84, %71 : vector<8x32xf32>
    %cst_27 = arith.constant 0.000000e+00 : f32
    %86 = vector.broadcast %cst_27 : f32 to vector<8x32xf32>
    %87 = arith.subf %86, %65 : vector<8x32xf32>
    %88 = arith.mulf %87, %65 : vector<8x32xf32>
    %89 = math.exp %88 : vector<8x32xf32>
    %90 = arith.mulf %85, %89 : vector<8x32xf32>
    %cst_28 = arith.constant 1.000000e+00 : f32
    %91 = vector.broadcast %cst_28 : f32 to vector<8x32xf32>
    %92 = arith.subf %91, %90 : vector<8x32xf32>
    %cst_29 = arith.constant 0.000000e+00 : f32
    %93 = vector.broadcast %cst_29 : f32 to vector<8x32xf32>
    %94 = arith.cmpf oge, %64, %93 : vector<8x32xf32>
    %cst_30 = arith.constant 0.000000e+00 : f32
    %95 = vector.broadcast %cst_30 : f32 to vector<8x32xf32>
    %96 = arith.subf %95, %92 : vector<8x32xf32>
    %97 = arith.select %94, %92, %96 : vector<8x32xi1>, vector<8x32xf32>
    %cst_31 = arith.constant 1.000000e+00 : f32
    %98 = vector.broadcast %cst_31 : f32 to vector<8x32xf32>
    %99 = arith.addf %98, %97 : vector<8x32xf32>
    %100 = arith.mulf %62, %99 : vector<8x32xf32>
    %c0_32 = arith.constant 0 : index
    %c0_33 = arith.constant 0 : index
    %101 = vector.load %arg4[%c0_32, %c0_33] : memref<32x32xf32, #tpu.memory_space<vmem>>, vector<32x32xf32>
    %cst_34 = arith.constant dense<0.000000e+00> : vector<8x32xf32>
    %102 = tpu.matmul %100, %101, %cst_34 {dimension_numbers = #tpu.dot_dimension_numbers<[1], [0], [0], [1], [0, 0, 1, 1], [], []>} : vector<8x32xf32>, vector<32x32xf32>, vector<8x32xf32> -> vector<8x32xf32>
    %103 = vector.extract_strided_slice %2 {offsets = [6, 0], sizes = [1, 32], strides = [1, 1]} : vector<14x32xf32> to vector<1x32xf32>
    %104 = vector.broadcast %103 : vector<1x32xf32> to vector<8x32xf32>
    %105 = arith.addf %102, %104 : vector<8x32xf32>
    %106 = arith.addf %32, %105 : vector<8x32xf32>
    %107 = vector.extract_strided_slice %4 {offsets = [0, 64], sizes = [8, 32], strides = [1, 1]} : vector<8x96xf32> to vector<8x32xf32>
    %cst_35 = arith.constant dense<0.000000e+00> : vector<8x64xf32>
    %108 = tpu.matmul %106, %1, %cst_35 {dimension_numbers = #tpu.dot_dimension_numbers<[1], [1], [0], [0], [0, 0, 1, 0], [], []>} : vector<8x32xf32>, vector<64x32xf32>, vector<8x64xf32> -> vector<8x64xf32>
    %109 = tpu.iota {dimensions = array<i32: 1>} : vector<8x64xi32>
    %110 = tpu.iota {dimensions = array<i32: 1>} : vector<8x16xi32>
    %cst_36 = arith.constant 0.000000e+00 : f32
    %111 = vector.broadcast %cst_36 : f32 to vector<8x64xf32>
    %cst_37 = arith.constant 0.000000e+00 : f32
    %112 = vector.broadcast %cst_37 : f32 to vector<8x16xf32>
    %cst_38 = arith.constant dense<0xFF800000> : vector<8xf32>
    %113 = vector.multi_reduction <maximumf>, %108, %cst_38 [1] : vector<8x64xf32> to vector<8xf32>
    %114 = vector.shape_cast %113 : vector<8xf32> to vector<8x1xf32>
    %115 = vector.broadcast %114 : vector<8x1xf32> to vector<8x64xf32>
    %116 = arith.cmpf oeq, %108, %115 : vector<8x64xf32>
    %c64_i32 = arith.constant 64 : i32
    %117 = vector.broadcast %c64_i32 : i32 to vector<8x64xi32>
    %118 = arith.select %116, %109, %117 : vector<8x64xi1>, vector<8x64xi32>
    %cst_39 = arith.constant dense<2147483647> : vector<8xi32>
    %119 = vector.multi_reduction <minsi>, %118, %cst_39 [1] : vector<8x64xi32> to vector<8xi32>
    %120 = vector.shape_cast %119 : vector<8xi32> to vector<8x1xi32>
    %121 = vector.broadcast %120 : vector<8x1xi32> to vector<8x64xi32>
    %122 = arith.cmpi eq, %109, %121 : vector<8x64xi32>
    %cst_40 = arith.constant 1.000000e+00 : f32
    %123 = vector.broadcast %cst_40 : f32 to vector<8x64xf32>
    %124 = arith.select %122, %123, %111 : vector<8x64xi1>, vector<8x64xf32>
    %cst_41 = arith.constant -1.000000e+30 : f32
    %125 = vector.broadcast %cst_41 : f32 to vector<8x64xf32>
    %126 = arith.select %122, %125, %108 : vector<8x64xi1>, vector<8x64xf32>
    %c0_i32 = arith.constant 0 : i32
    %127 = vector.broadcast %c0_i32 : i32 to vector<8x16xi32>
    %128 = arith.cmpi eq, %110, %127 : vector<8x16xi32>
    %129 = vector.shape_cast %114 : vector<8x1xf32> to vector<8x1xf32>
    %130 = vector.broadcast %129 : vector<8x1xf32> to vector<8x16xf32>
    %131 = arith.select %128, %130, %112 : vector<8x16xi1>, vector<8x16xf32>
    %cst_42 = arith.constant dense<0xFF800000> : vector<8xf32>
    %132 = vector.multi_reduction <maximumf>, %126, %cst_42 [1] : vector<8x64xf32> to vector<8xf32>
    %133 = vector.shape_cast %132 : vector<8xf32> to vector<8x1xf32>
    %134 = vector.broadcast %133 : vector<8x1xf32> to vector<8x64xf32>
    %135 = arith.cmpf oeq, %126, %134 : vector<8x64xf32>
    %c64_i32_43 = arith.constant 64 : i32
    %136 = vector.broadcast %c64_i32_43 : i32 to vector<8x64xi32>
    %137 = arith.select %135, %109, %136 : vector<8x64xi1>, vector<8x64xi32>
    %cst_44 = arith.constant dense<2147483647> : vector<8xi32>
    %138 = vector.multi_reduction <minsi>, %137, %cst_44 [1] : vector<8x64xi32> to vector<8xi32>
    %139 = vector.shape_cast %138 : vector<8xi32> to vector<8x1xi32>
    %140 = vector.broadcast %139 : vector<8x1xi32> to vector<8x64xi32>
    %141 = arith.cmpi eq, %109, %140 : vector<8x64xi32>
    %cst_45 = arith.constant 1.000000e+00 : f32
    %142 = vector.broadcast %cst_45 : f32 to vector<8x64xf32>
    %143 = arith.select %141, %142, %124 : vector<8x64xi1>, vector<8x64xf32>
    %cst_46 = arith.constant -1.000000e+30 : f32
    %144 = vector.broadcast %cst_46 : f32 to vector<8x64xf32>
    %145 = arith.select %141, %144, %126 : vector<8x64xi1>, vector<8x64xf32>
    %c1_i32 = arith.constant 1 : i32
    %146 = vector.broadcast %c1_i32 : i32 to vector<8x16xi32>
    %147 = arith.cmpi eq, %110, %146 : vector<8x16xi32>
    %148 = vector.shape_cast %133 : vector<8x1xf32> to vector<8x1xf32>
    %149 = vector.broadcast %148 : vector<8x1xf32> to vector<8x16xf32>
    %150 = arith.select %147, %149, %131 : vector<8x16xi1>, vector<8x16xf32>
    %cst_47 = arith.constant dense<0xFF800000> : vector<8xf32>
    %151 = vector.multi_reduction <maximumf>, %145, %cst_47 [1] : vector<8x64xf32> to vector<8xf32>
    %152 = vector.shape_cast %151 : vector<8xf32> to vector<8x1xf32>
    %153 = vector.broadcast %152 : vector<8x1xf32> to vector<8x64xf32>
    %154 = arith.cmpf oeq, %145, %153 : vector<8x64xf32>
    %c64_i32_48 = arith.constant 64 : i32
    %155 = vector.broadcast %c64_i32_48 : i32 to vector<8x64xi32>
    %156 = arith.select %154, %109, %155 : vector<8x64xi1>, vector<8x64xi32>
    %cst_49 = arith.constant dense<2147483647> : vector<8xi32>
    %157 = vector.multi_reduction <minsi>, %156, %cst_49 [1] : vector<8x64xi32> to vector<8xi32>
    %158 = vector.shape_cast %157 : vector<8xi32> to vector<8x1xi32>
    %159 = vector.broadcast %158 : vector<8x1xi32> to vector<8x64xi32>
    %160 = arith.cmpi eq, %109, %159 : vector<8x64xi32>
    %cst_50 = arith.constant 1.000000e+00 : f32
    %161 = vector.broadcast %cst_50 : f32 to vector<8x64xf32>
    %162 = arith.select %160, %161, %143 : vector<8x64xi1>, vector<8x64xf32>
    %cst_51 = arith.constant -1.000000e+30 : f32
    %163 = vector.broadcast %cst_51 : f32 to vector<8x64xf32>
    %164 = arith.select %160, %163, %145 : vector<8x64xi1>, vector<8x64xf32>
    %c2_i32 = arith.constant 2 : i32
    %165 = vector.broadcast %c2_i32 : i32 to vector<8x16xi32>
    %166 = arith.cmpi eq, %110, %165 : vector<8x16xi32>
    %167 = vector.shape_cast %152 : vector<8x1xf32> to vector<8x1xf32>
    %168 = vector.broadcast %167 : vector<8x1xf32> to vector<8x16xf32>
    %169 = arith.select %166, %168, %150 : vector<8x16xi1>, vector<8x16xf32>
    %cst_52 = arith.constant dense<0xFF800000> : vector<8xf32>
    %170 = vector.multi_reduction <maximumf>, %164, %cst_52 [1] : vector<8x64xf32> to vector<8xf32>
    %171 = vector.shape_cast %170 : vector<8xf32> to vector<8x1xf32>
    %172 = vector.broadcast %171 : vector<8x1xf32> to vector<8x64xf32>
    %173 = arith.cmpf oeq, %164, %172 : vector<8x64xf32>
    %c64_i32_53 = arith.constant 64 : i32
    %174 = vector.broadcast %c64_i32_53 : i32 to vector<8x64xi32>
    %175 = arith.select %173, %109, %174 : vector<8x64xi1>, vector<8x64xi32>
    %cst_54 = arith.constant dense<2147483647> : vector<8xi32>
    %176 = vector.multi_reduction <minsi>, %175, %cst_54 [1] : vector<8x64xi32> to vector<8xi32>
    %177 = vector.shape_cast %176 : vector<8xi32> to vector<8x1xi32>
    %178 = vector.broadcast %177 : vector<8x1xi32> to vector<8x64xi32>
    %179 = arith.cmpi eq, %109, %178 : vector<8x64xi32>
    %cst_55 = arith.constant 1.000000e+00 : f32
    %180 = vector.broadcast %cst_55 : f32 to vector<8x64xf32>
    %181 = arith.select %179, %180, %162 : vector<8x64xi1>, vector<8x64xf32>
    %cst_56 = arith.constant -1.000000e+30 : f32
    %182 = vector.broadcast %cst_56 : f32 to vector<8x64xf32>
    %183 = arith.select %179, %182, %164 : vector<8x64xi1>, vector<8x64xf32>
    %c3_i32 = arith.constant 3 : i32
    %184 = vector.broadcast %c3_i32 : i32 to vector<8x16xi32>
    %185 = arith.cmpi eq, %110, %184 : vector<8x16xi32>
    %186 = vector.shape_cast %171 : vector<8x1xf32> to vector<8x1xf32>
    %187 = vector.broadcast %186 : vector<8x1xf32> to vector<8x16xf32>
    %188 = arith.select %185, %187, %169 : vector<8x16xi1>, vector<8x16xf32>
    %cst_57 = arith.constant dense<0xFF800000> : vector<8xf32>
    %189 = vector.multi_reduction <maximumf>, %183, %cst_57 [1] : vector<8x64xf32> to vector<8xf32>
    %190 = vector.shape_cast %189 : vector<8xf32> to vector<8x1xf32>
    %191 = vector.broadcast %190 : vector<8x1xf32> to vector<8x64xf32>
    %192 = arith.cmpf oeq, %183, %191 : vector<8x64xf32>
    %c64_i32_58 = arith.constant 64 : i32
    %193 = vector.broadcast %c64_i32_58 : i32 to vector<8x64xi32>
    %194 = arith.select %192, %109, %193 : vector<8x64xi1>, vector<8x64xi32>
    %cst_59 = arith.constant dense<2147483647> : vector<8xi32>
    %195 = vector.multi_reduction <minsi>, %194, %cst_59 [1] : vector<8x64xi32> to vector<8xi32>
    %196 = vector.shape_cast %195 : vector<8xi32> to vector<8x1xi32>
    %197 = vector.broadcast %196 : vector<8x1xi32> to vector<8x64xi32>
    %198 = arith.cmpi eq, %109, %197 : vector<8x64xi32>
    %cst_60 = arith.constant 1.000000e+00 : f32
    %199 = vector.broadcast %cst_60 : f32 to vector<8x64xf32>
    %200 = arith.select %198, %199, %181 : vector<8x64xi1>, vector<8x64xf32>
    %cst_61 = arith.constant -1.000000e+30 : f32
    %201 = vector.broadcast %cst_61 : f32 to vector<8x64xf32>
    %202 = arith.select %198, %201, %183 : vector<8x64xi1>, vector<8x64xf32>
    %c4_i32 = arith.constant 4 : i32
    %203 = vector.broadcast %c4_i32 : i32 to vector<8x16xi32>
    %204 = arith.cmpi eq, %110, %203 : vector<8x16xi32>
    %205 = vector.shape_cast %190 : vector<8x1xf32> to vector<8x1xf32>
    %206 = vector.broadcast %205 : vector<8x1xf32> to vector<8x16xf32>
    %207 = arith.select %204, %206, %188 : vector<8x16xi1>, vector<8x16xf32>
    %cst_62 = arith.constant dense<0xFF800000> : vector<8xf32>
    %208 = vector.multi_reduction <maximumf>, %202, %cst_62 [1] : vector<8x64xf32> to vector<8xf32>
    %209 = vector.shape_cast %208 : vector<8xf32> to vector<8x1xf32>
    %210 = vector.broadcast %209 : vector<8x1xf32> to vector<8x64xf32>
    %211 = arith.cmpf oeq, %202, %210 : vector<8x64xf32>
    %c64_i32_63 = arith.constant 64 : i32
    %212 = vector.broadcast %c64_i32_63 : i32 to vector<8x64xi32>
    %213 = arith.select %211, %109, %212 : vector<8x64xi1>, vector<8x64xi32>
    %cst_64 = arith.constant dense<2147483647> : vector<8xi32>
    %214 = vector.multi_reduction <minsi>, %213, %cst_64 [1] : vector<8x64xi32> to vector<8xi32>
    %215 = vector.shape_cast %214 : vector<8xi32> to vector<8x1xi32>
    %216 = vector.broadcast %215 : vector<8x1xi32> to vector<8x64xi32>
    %217 = arith.cmpi eq, %109, %216 : vector<8x64xi32>
    %cst_65 = arith.constant 1.000000e+00 : f32
    %218 = vector.broadcast %cst_65 : f32 to vector<8x64xf32>
    %219 = arith.select %217, %218, %200 : vector<8x64xi1>, vector<8x64xf32>
    %cst_66 = arith.constant -1.000000e+30 : f32
    %220 = vector.broadcast %cst_66 : f32 to vector<8x64xf32>
    %221 = arith.select %217, %220, %202 : vector<8x64xi1>, vector<8x64xf32>
    %c5_i32 = arith.constant 5 : i32
    %222 = vector.broadcast %c5_i32 : i32 to vector<8x16xi32>
    %223 = arith.cmpi eq, %110, %222 : vector<8x16xi32>
    %224 = vector.shape_cast %209 : vector<8x1xf32> to vector<8x1xf32>
    %225 = vector.broadcast %224 : vector<8x1xf32> to vector<8x16xf32>
    %226 = arith.select %223, %225, %207 : vector<8x16xi1>, vector<8x16xf32>
    %cst_67 = arith.constant dense<0xFF800000> : vector<8xf32>
    %227 = vector.multi_reduction <maximumf>, %221, %cst_67 [1] : vector<8x64xf32> to vector<8xf32>
    %228 = vector.shape_cast %227 : vector<8xf32> to vector<8x1xf32>
    %229 = vector.broadcast %228 : vector<8x1xf32> to vector<8x64xf32>
    %230 = arith.cmpf oeq, %221, %229 : vector<8x64xf32>
    %c64_i32_68 = arith.constant 64 : i32
    %231 = vector.broadcast %c64_i32_68 : i32 to vector<8x64xi32>
    %232 = arith.select %230, %109, %231 : vector<8x64xi1>, vector<8x64xi32>
    %cst_69 = arith.constant dense<2147483647> : vector<8xi32>
    %233 = vector.multi_reduction <minsi>, %232, %cst_69 [1] : vector<8x64xi32> to vector<8xi32>
    %234 = vector.shape_cast %233 : vector<8xi32> to vector<8x1xi32>
    %235 = vector.broadcast %234 : vector<8x1xi32> to vector<8x64xi32>
    %236 = arith.cmpi eq, %109, %235 : vector<8x64xi32>
    %cst_70 = arith.constant 1.000000e+00 : f32
    %237 = vector.broadcast %cst_70 : f32 to vector<8x64xf32>
    %238 = arith.select %236, %237, %219 : vector<8x64xi1>, vector<8x64xf32>
    %cst_71 = arith.constant -1.000000e+30 : f32
    %239 = vector.broadcast %cst_71 : f32 to vector<8x64xf32>
    %240 = arith.select %236, %239, %221 : vector<8x64xi1>, vector<8x64xf32>
    %c6_i32 = arith.constant 6 : i32
    %241 = vector.broadcast %c6_i32 : i32 to vector<8x16xi32>
    %242 = arith.cmpi eq, %110, %241 : vector<8x16xi32>
    %243 = vector.shape_cast %228 : vector<8x1xf32> to vector<8x1xf32>
    %244 = vector.broadcast %243 : vector<8x1xf32> to vector<8x16xf32>
    %245 = arith.select %242, %244, %226 : vector<8x16xi1>, vector<8x16xf32>
    %cst_72 = arith.constant dense<0xFF800000> : vector<8xf32>
    %246 = vector.multi_reduction <maximumf>, %240, %cst_72 [1] : vector<8x64xf32> to vector<8xf32>
    %247 = vector.shape_cast %246 : vector<8xf32> to vector<8x1xf32>
    %248 = vector.broadcast %247 : vector<8x1xf32> to vector<8x64xf32>
    %249 = arith.cmpf oeq, %240, %248 : vector<8x64xf32>
    %c64_i32_73 = arith.constant 64 : i32
    %250 = vector.broadcast %c64_i32_73 : i32 to vector<8x64xi32>
    %251 = arith.select %249, %109, %250 : vector<8x64xi1>, vector<8x64xi32>
    %cst_74 = arith.constant dense<2147483647> : vector<8xi32>
    %252 = vector.multi_reduction <minsi>, %251, %cst_74 [1] : vector<8x64xi32> to vector<8xi32>
    %253 = vector.shape_cast %252 : vector<8xi32> to vector<8x1xi32>
    %254 = vector.broadcast %253 : vector<8x1xi32> to vector<8x64xi32>
    %255 = arith.cmpi eq, %109, %254 : vector<8x64xi32>
    %cst_75 = arith.constant 1.000000e+00 : f32
    %256 = vector.broadcast %cst_75 : f32 to vector<8x64xf32>
    %257 = arith.select %255, %256, %238 : vector<8x64xi1>, vector<8x64xf32>
    %cst_76 = arith.constant -1.000000e+30 : f32
    %258 = vector.broadcast %cst_76 : f32 to vector<8x64xf32>
    %259 = arith.select %255, %258, %240 : vector<8x64xi1>, vector<8x64xf32>
    %c7_i32 = arith.constant 7 : i32
    %260 = vector.broadcast %c7_i32 : i32 to vector<8x16xi32>
    %261 = arith.cmpi eq, %110, %260 : vector<8x16xi32>
    %262 = vector.shape_cast %247 : vector<8x1xf32> to vector<8x1xf32>
    %263 = vector.broadcast %262 : vector<8x1xf32> to vector<8x16xf32>
    %264 = arith.select %261, %263, %245 : vector<8x16xi1>, vector<8x16xf32>
    %cst_77 = arith.constant dense<0xFF800000> : vector<8xf32>
    %265 = vector.multi_reduction <maximumf>, %259, %cst_77 [1] : vector<8x64xf32> to vector<8xf32>
    %266 = vector.shape_cast %265 : vector<8xf32> to vector<8x1xf32>
    %267 = vector.broadcast %266 : vector<8x1xf32> to vector<8x64xf32>
    %268 = arith.cmpf oeq, %259, %267 : vector<8x64xf32>
    %c64_i32_78 = arith.constant 64 : i32
    %269 = vector.broadcast %c64_i32_78 : i32 to vector<8x64xi32>
    %270 = arith.select %268, %109, %269 : vector<8x64xi1>, vector<8x64xi32>
    %cst_79 = arith.constant dense<2147483647> : vector<8xi32>
    %271 = vector.multi_reduction <minsi>, %270, %cst_79 [1] : vector<8x64xi32> to vector<8xi32>
    %272 = vector.shape_cast %271 : vector<8xi32> to vector<8x1xi32>
    %273 = vector.broadcast %272 : vector<8x1xi32> to vector<8x64xi32>
    %274 = arith.cmpi eq, %109, %273 : vector<8x64xi32>
    %cst_80 = arith.constant 1.000000e+00 : f32
    %275 = vector.broadcast %cst_80 : f32 to vector<8x64xf32>
    %276 = arith.select %274, %275, %257 : vector<8x64xi1>, vector<8x64xf32>
    %cst_81 = arith.constant -1.000000e+30 : f32
    %277 = vector.broadcast %cst_81 : f32 to vector<8x64xf32>
    %278 = arith.select %274, %277, %259 : vector<8x64xi1>, vector<8x64xf32>
    %c8_i32 = arith.constant 8 : i32
    %279 = vector.broadcast %c8_i32 : i32 to vector<8x16xi32>
    %280 = arith.cmpi eq, %110, %279 : vector<8x16xi32>
    %281 = vector.shape_cast %266 : vector<8x1xf32> to vector<8x1xf32>
    %282 = vector.broadcast %281 : vector<8x1xf32> to vector<8x16xf32>
    %283 = arith.select %280, %282, %264 : vector<8x16xi1>, vector<8x16xf32>
    %cst_82 = arith.constant dense<0xFF800000> : vector<8xf32>
    %284 = vector.multi_reduction <maximumf>, %278, %cst_82 [1] : vector<8x64xf32> to vector<8xf32>
    %285 = vector.shape_cast %284 : vector<8xf32> to vector<8x1xf32>
    %286 = vector.broadcast %285 : vector<8x1xf32> to vector<8x64xf32>
    %287 = arith.cmpf oeq, %278, %286 : vector<8x64xf32>
    %c64_i32_83 = arith.constant 64 : i32
    %288 = vector.broadcast %c64_i32_83 : i32 to vector<8x64xi32>
    %289 = arith.select %287, %109, %288 : vector<8x64xi1>, vector<8x64xi32>
    %cst_84 = arith.constant dense<2147483647> : vector<8xi32>
    %290 = vector.multi_reduction <minsi>, %289, %cst_84 [1] : vector<8x64xi32> to vector<8xi32>
    %291 = vector.shape_cast %290 : vector<8xi32> to vector<8x1xi32>
    %292 = vector.broadcast %291 : vector<8x1xi32> to vector<8x64xi32>
    %293 = arith.cmpi eq, %109, %292 : vector<8x64xi32>
    %cst_85 = arith.constant 1.000000e+00 : f32
    %294 = vector.broadcast %cst_85 : f32 to vector<8x64xf32>
    %295 = arith.select %293, %294, %276 : vector<8x64xi1>, vector<8x64xf32>
    %cst_86 = arith.constant -1.000000e+30 : f32
    %296 = vector.broadcast %cst_86 : f32 to vector<8x64xf32>
    %297 = arith.select %293, %296, %278 : vector<8x64xi1>, vector<8x64xf32>
    %c9_i32 = arith.constant 9 : i32
    %298 = vector.broadcast %c9_i32 : i32 to vector<8x16xi32>
    %299 = arith.cmpi eq, %110, %298 : vector<8x16xi32>
    %300 = vector.shape_cast %285 : vector<8x1xf32> to vector<8x1xf32>
    %301 = vector.broadcast %300 : vector<8x1xf32> to vector<8x16xf32>
    %302 = arith.select %299, %301, %283 : vector<8x16xi1>, vector<8x16xf32>
    %cst_87 = arith.constant dense<0xFF800000> : vector<8xf32>
    %303 = vector.multi_reduction <maximumf>, %297, %cst_87 [1] : vector<8x64xf32> to vector<8xf32>
    %304 = vector.shape_cast %303 : vector<8xf32> to vector<8x1xf32>
    %305 = vector.broadcast %304 : vector<8x1xf32> to vector<8x64xf32>
    %306 = arith.cmpf oeq, %297, %305 : vector<8x64xf32>
    %c64_i32_88 = arith.constant 64 : i32
    %307 = vector.broadcast %c64_i32_88 : i32 to vector<8x64xi32>
    %308 = arith.select %306, %109, %307 : vector<8x64xi1>, vector<8x64xi32>
    %cst_89 = arith.constant dense<2147483647> : vector<8xi32>
    %309 = vector.multi_reduction <minsi>, %308, %cst_89 [1] : vector<8x64xi32> to vector<8xi32>
    %310 = vector.shape_cast %309 : vector<8xi32> to vector<8x1xi32>
    %311 = vector.broadcast %310 : vector<8x1xi32> to vector<8x64xi32>
    %312 = arith.cmpi eq, %109, %311 : vector<8x64xi32>
    %cst_90 = arith.constant 1.000000e+00 : f32
    %313 = vector.broadcast %cst_90 : f32 to vector<8x64xf32>
    %314 = arith.select %312, %313, %295 : vector<8x64xi1>, vector<8x64xf32>
    %cst_91 = arith.constant -1.000000e+30 : f32
    %315 = vector.broadcast %cst_91 : f32 to vector<8x64xf32>
    %316 = arith.select %312, %315, %297 : vector<8x64xi1>, vector<8x64xf32>
    %c10_i32 = arith.constant 10 : i32
    %317 = vector.broadcast %c10_i32 : i32 to vector<8x16xi32>
    %318 = arith.cmpi eq, %110, %317 : vector<8x16xi32>
    %319 = vector.shape_cast %304 : vector<8x1xf32> to vector<8x1xf32>
    %320 = vector.broadcast %319 : vector<8x1xf32> to vector<8x16xf32>
    %321 = arith.select %318, %320, %302 : vector<8x16xi1>, vector<8x16xf32>
    %cst_92 = arith.constant dense<0xFF800000> : vector<8xf32>
    %322 = vector.multi_reduction <maximumf>, %316, %cst_92 [1] : vector<8x64xf32> to vector<8xf32>
    %323 = vector.shape_cast %322 : vector<8xf32> to vector<8x1xf32>
    %324 = vector.broadcast %323 : vector<8x1xf32> to vector<8x64xf32>
    %325 = arith.cmpf oeq, %316, %324 : vector<8x64xf32>
    %c64_i32_93 = arith.constant 64 : i32
    %326 = vector.broadcast %c64_i32_93 : i32 to vector<8x64xi32>
    %327 = arith.select %325, %109, %326 : vector<8x64xi1>, vector<8x64xi32>
    %cst_94 = arith.constant dense<2147483647> : vector<8xi32>
    %328 = vector.multi_reduction <minsi>, %327, %cst_94 [1] : vector<8x64xi32> to vector<8xi32>
    %329 = vector.shape_cast %328 : vector<8xi32> to vector<8x1xi32>
    %330 = vector.broadcast %329 : vector<8x1xi32> to vector<8x64xi32>
    %331 = arith.cmpi eq, %109, %330 : vector<8x64xi32>
    %cst_95 = arith.constant 1.000000e+00 : f32
    %332 = vector.broadcast %cst_95 : f32 to vector<8x64xf32>
    %333 = arith.select %331, %332, %314 : vector<8x64xi1>, vector<8x64xf32>
    %cst_96 = arith.constant -1.000000e+30 : f32
    %334 = vector.broadcast %cst_96 : f32 to vector<8x64xf32>
    %335 = arith.select %331, %334, %316 : vector<8x64xi1>, vector<8x64xf32>
    %c11_i32 = arith.constant 11 : i32
    %336 = vector.broadcast %c11_i32 : i32 to vector<8x16xi32>
    %337 = arith.cmpi eq, %110, %336 : vector<8x16xi32>
    %338 = vector.shape_cast %323 : vector<8x1xf32> to vector<8x1xf32>
    %339 = vector.broadcast %338 : vector<8x1xf32> to vector<8x16xf32>
    %340 = arith.select %337, %339, %321 : vector<8x16xi1>, vector<8x16xf32>
    %cst_97 = arith.constant dense<0xFF800000> : vector<8xf32>
    %341 = vector.multi_reduction <maximumf>, %335, %cst_97 [1] : vector<8x64xf32> to vector<8xf32>
    %342 = vector.shape_cast %341 : vector<8xf32> to vector<8x1xf32>
    %343 = vector.broadcast %342 : vector<8x1xf32> to vector<8x64xf32>
    %344 = arith.cmpf oeq, %335, %343 : vector<8x64xf32>
    %c64_i32_98 = arith.constant 64 : i32
    %345 = vector.broadcast %c64_i32_98 : i32 to vector<8x64xi32>
    %346 = arith.select %344, %109, %345 : vector<8x64xi1>, vector<8x64xi32>
    %cst_99 = arith.constant dense<2147483647> : vector<8xi32>
    %347 = vector.multi_reduction <minsi>, %346, %cst_99 [1] : vector<8x64xi32> to vector<8xi32>
    %348 = vector.shape_cast %347 : vector<8xi32> to vector<8x1xi32>
    %349 = vector.broadcast %348 : vector<8x1xi32> to vector<8x64xi32>
    %350 = arith.cmpi eq, %109, %349 : vector<8x64xi32>
    %cst_100 = arith.constant 1.000000e+00 : f32
    %351 = vector.broadcast %cst_100 : f32 to vector<8x64xf32>
    %352 = arith.select %350, %351, %333 : vector<8x64xi1>, vector<8x64xf32>
    %cst_101 = arith.constant -1.000000e+30 : f32
    %353 = vector.broadcast %cst_101 : f32 to vector<8x64xf32>
    %354 = arith.select %350, %353, %335 : vector<8x64xi1>, vector<8x64xf32>
    %c12_i32 = arith.constant 12 : i32
    %355 = vector.broadcast %c12_i32 : i32 to vector<8x16xi32>
    %356 = arith.cmpi eq, %110, %355 : vector<8x16xi32>
    %357 = vector.shape_cast %342 : vector<8x1xf32> to vector<8x1xf32>
    %358 = vector.broadcast %357 : vector<8x1xf32> to vector<8x16xf32>
    %359 = arith.select %356, %358, %340 : vector<8x16xi1>, vector<8x16xf32>
    %cst_102 = arith.constant dense<0xFF800000> : vector<8xf32>
    %360 = vector.multi_reduction <maximumf>, %354, %cst_102 [1] : vector<8x64xf32> to vector<8xf32>
    %361 = vector.shape_cast %360 : vector<8xf32> to vector<8x1xf32>
    %362 = vector.broadcast %361 : vector<8x1xf32> to vector<8x64xf32>
    %363 = arith.cmpf oeq, %354, %362 : vector<8x64xf32>
    %c64_i32_103 = arith.constant 64 : i32
    %364 = vector.broadcast %c64_i32_103 : i32 to vector<8x64xi32>
    %365 = arith.select %363, %109, %364 : vector<8x64xi1>, vector<8x64xi32>
    %cst_104 = arith.constant dense<2147483647> : vector<8xi32>
    %366 = vector.multi_reduction <minsi>, %365, %cst_104 [1] : vector<8x64xi32> to vector<8xi32>
    %367 = vector.shape_cast %366 : vector<8xi32> to vector<8x1xi32>
    %368 = vector.broadcast %367 : vector<8x1xi32> to vector<8x64xi32>
    %369 = arith.cmpi eq, %109, %368 : vector<8x64xi32>
    %cst_105 = arith.constant 1.000000e+00 : f32
    %370 = vector.broadcast %cst_105 : f32 to vector<8x64xf32>
    %371 = arith.select %369, %370, %352 : vector<8x64xi1>, vector<8x64xf32>
    %cst_106 = arith.constant -1.000000e+30 : f32
    %372 = vector.broadcast %cst_106 : f32 to vector<8x64xf32>
    %373 = arith.select %369, %372, %354 : vector<8x64xi1>, vector<8x64xf32>
    %c13_i32 = arith.constant 13 : i32
    %374 = vector.broadcast %c13_i32 : i32 to vector<8x16xi32>
    %375 = arith.cmpi eq, %110, %374 : vector<8x16xi32>
    %376 = vector.shape_cast %361 : vector<8x1xf32> to vector<8x1xf32>
    %377 = vector.broadcast %376 : vector<8x1xf32> to vector<8x16xf32>
    %378 = arith.select %375, %377, %359 : vector<8x16xi1>, vector<8x16xf32>
    %cst_107 = arith.constant dense<0xFF800000> : vector<8xf32>
    %379 = vector.multi_reduction <maximumf>, %373, %cst_107 [1] : vector<8x64xf32> to vector<8xf32>
    %380 = vector.shape_cast %379 : vector<8xf32> to vector<8x1xf32>
    %381 = vector.broadcast %380 : vector<8x1xf32> to vector<8x64xf32>
    %382 = arith.cmpf oeq, %373, %381 : vector<8x64xf32>
    %c64_i32_108 = arith.constant 64 : i32
    %383 = vector.broadcast %c64_i32_108 : i32 to vector<8x64xi32>
    %384 = arith.select %382, %109, %383 : vector<8x64xi1>, vector<8x64xi32>
    %cst_109 = arith.constant dense<2147483647> : vector<8xi32>
    %385 = vector.multi_reduction <minsi>, %384, %cst_109 [1] : vector<8x64xi32> to vector<8xi32>
    %386 = vector.shape_cast %385 : vector<8xi32> to vector<8x1xi32>
    %387 = vector.broadcast %386 : vector<8x1xi32> to vector<8x64xi32>
    %388 = arith.cmpi eq, %109, %387 : vector<8x64xi32>
    %cst_110 = arith.constant 1.000000e+00 : f32
    %389 = vector.broadcast %cst_110 : f32 to vector<8x64xf32>
    %390 = arith.select %388, %389, %371 : vector<8x64xi1>, vector<8x64xf32>
    %cst_111 = arith.constant -1.000000e+30 : f32
    %391 = vector.broadcast %cst_111 : f32 to vector<8x64xf32>
    %392 = arith.select %388, %391, %373 : vector<8x64xi1>, vector<8x64xf32>
    %c14_i32 = arith.constant 14 : i32
    %393 = vector.broadcast %c14_i32 : i32 to vector<8x16xi32>
    %394 = arith.cmpi eq, %110, %393 : vector<8x16xi32>
    %395 = vector.shape_cast %380 : vector<8x1xf32> to vector<8x1xf32>
    %396 = vector.broadcast %395 : vector<8x1xf32> to vector<8x16xf32>
    %397 = arith.select %394, %396, %378 : vector<8x16xi1>, vector<8x16xf32>
    %cst_112 = arith.constant dense<0xFF800000> : vector<8xf32>
    %398 = vector.multi_reduction <maximumf>, %392, %cst_112 [1] : vector<8x64xf32> to vector<8xf32>
    %399 = vector.shape_cast %398 : vector<8xf32> to vector<8x1xf32>
    %400 = vector.broadcast %399 : vector<8x1xf32> to vector<8x64xf32>
    %401 = arith.cmpf oeq, %392, %400 : vector<8x64xf32>
    %c64_i32_113 = arith.constant 64 : i32
    %402 = vector.broadcast %c64_i32_113 : i32 to vector<8x64xi32>
    %403 = arith.select %401, %109, %402 : vector<8x64xi1>, vector<8x64xi32>
    %cst_114 = arith.constant dense<2147483647> : vector<8xi32>
    %404 = vector.multi_reduction <minsi>, %403, %cst_114 [1] : vector<8x64xi32> to vector<8xi32>
    %405 = vector.shape_cast %404 : vector<8xi32> to vector<8x1xi32>
    %406 = vector.broadcast %405 : vector<8x1xi32> to vector<8x64xi32>
    %407 = arith.cmpi eq, %109, %406 : vector<8x64xi32>
    %cst_115 = arith.constant 1.000000e+00 : f32
    %408 = vector.broadcast %cst_115 : f32 to vector<8x64xf32>
    %409 = arith.select %407, %408, %390 : vector<8x64xi1>, vector<8x64xf32>
    %c15_i32 = arith.constant 15 : i32
    %410 = vector.broadcast %c15_i32 : i32 to vector<8x16xi32>
    %411 = arith.cmpi eq, %110, %410 : vector<8x16xi32>
    %412 = vector.shape_cast %399 : vector<8x1xf32> to vector<8x1xf32>
    %413 = vector.broadcast %412 : vector<8x1xf32> to vector<8x16xf32>
    %414 = arith.select %411, %413, %397 : vector<8x16xi1>, vector<8x16xf32>
    %c0_116 = arith.constant 0 : index
    %c0_117 = arith.constant 0 : index
    %415 = vector.load %arg9[%c0_116, %c0_117] : memref<8x16xf32, #tpu.memory_space<vmem>>, vector<8x16xf32>
    tpu.vector_store %arg9[%c0_116, %c0_117], %414 {strides = array<i32>} : memref<8x16xf32, #tpu.memory_space<vmem>>, vector<8x16xf32>,
    %cst_118 = arith.constant 0.000000e+00 : f32
    %416 = vector.broadcast %cst_118 : f32 to vector<8x64xf32>
    %417 = arith.cmpf ogt, %409, %416 : vector<8x64xf32>
    %cst_119 = arith.constant -1.000000e+30 : f32
    %418 = vector.broadcast %cst_119 : f32 to vector<8x64xf32>
    %419 = arith.select %417, %108, %418 : vector<8x64xi1>, vector<8x64xf32>
    %cst_120 = arith.constant dense<0xFF800000> : vector<8xf32>
    %420 = vector.multi_reduction <maximumf>, %419, %cst_120 [1] : vector<8x64xf32> to vector<8xf32>
    %421 = vector.shape_cast %420 : vector<8xf32> to vector<8x1xf32>
    %422 = vector.broadcast %421 : vector<8x1xf32> to vector<8x64xf32>
    %423 = arith.subf %419, %422 : vector<8x64xf32>
    %424 = math.exp %423 : vector<8x64xf32>
    %cst_121 = arith.constant dense<0.000000e+00> : vector<8xf32>
    %425 = vector.multi_reduction <add>, %424, %cst_121 [1] : vector<8x64xf32> to vector<8xf32>
    %426 = vector.shape_cast %425 : vector<8xf32> to vector<8x1xf32>
    %427 = tpu.reciprocal %426 {approx = true} : vector<8x1xf32> -> vector<8x1xf32>
    %428 = arith.mulf %426, %427 : vector<8x1xf32>
    %cst_122 = arith.constant 2.000000e+00 : f32
    %429 = vector.broadcast %cst_122 : f32 to vector<8x1xf32>
    %430 = arith.subf %429, %428 : vector<8x1xf32>
    %431 = arith.mulf %427, %430 : vector<8x1xf32>
    %432 = vector.broadcast %431 : vector<8x1xf32> to vector<8x64xf32>
    %433 = arith.mulf %424, %432 : vector<8x64xf32>
    %cst_123 = arith.constant dense<0.000000e+00> : vector<8x32xf32>
    %434 = tpu.matmul %433, %1, %cst_123 {dimension_numbers = #tpu.dot_dimension_numbers<[1], [0], [0], [1], [0, 0, 1, 1], [], []>} : vector<8x64xf32>, vector<64x32xf32>, vector<8x32xf32> -> vector<8x32xf32>
    %c0_124 = arith.constant 0 : index
    %c0_125 = arith.constant 0 : index
    %435 = vector.load %arg5[%c0_124, %c0_125] : memref<32x64xf32, #tpu.memory_space<vmem>>, vector<32x64xf32>
    %cst_126 = arith.constant dense<0.000000e+00> : vector<8x64xf32>
    %436 = tpu.matmul %434, %435, %cst_126 {dimension_numbers = #tpu.dot_dimension_numbers<[1], [0], [0], [1], [0, 0, 1, 1], [], []>} : vector<8x32xf32>, vector<32x64xf32>, vector<8x64xf32> -> vector<8x64xf32>
    %437 = vector.extract_strided_slice %436 {offsets = [0, 0], sizes = [8, 32], strides = [1, 1]} : vector<8x64xf32> to vector<8x32xf32>
    %438 = vector.extract_strided_slice %436 {offsets = [0, 32], sizes = [8, 32], strides = [1, 1]} : vector<8x64xf32> to vector<8x32xf32>
    %439 = vector.extract_strided_slice %2 {offsets = [11, 0], sizes = [1, 32], strides = [1, 1]} : vector<14x32xf32> to vector<1x32xf32>
    %440 = vector.broadcast %439 : vector<1x32xf32> to vector<8x32xf32>
    %441 = arith.addf %438, %440 : vector<8x32xf32>
    %442 = arith.addf %107, %437 : vector<8x32xf32>
    %443 = vector.extract_strided_slice %2 {offsets = [7, 0], sizes = [1, 32], strides = [1, 1]} : vector<14x32xf32> to vector<1x32xf32>
    %444 = vector.broadcast %443 : vector<1x32xf32> to vector<8x32xf32>
    %445 = arith.addf %442, %444 : vector<8x32xf32>
    %446 = vector.extract_strided_slice %2 {offsets = [8, 0], sizes = [1, 32], strides = [1, 1]} : vector<14x32xf32> to vector<1x32xf32>
    %447 = vector.extract_strided_slice %2 {offsets = [9, 0], sizes = [1, 32], strides = [1, 1]} : vector<14x32xf32> to vector<1x32xf32>
    %cst_127 = arith.constant dense<0.000000e+00> : vector<8xf32>
    %448 = vector.multi_reduction <add>, %445, %cst_127 [1] : vector<8x32xf32> to vector<8xf32>
    %449 = vector.shape_cast %448 : vector<8xf32> to vector<8x1xf32>
    %cst_128 = arith.constant 3.200000e+01 : f32
    %450 = vector.broadcast %cst_128 : f32 to vector<8x1xf32>
    %451 = arith.divf %449, %450 : vector<8x1xf32>
    %452 = vector.broadcast %451 : vector<8x1xf32> to vector<8x32xf32>
    %453 = arith.subf %445, %452 : vector<8x32xf32>
    %454 = arith.mulf %453, %453 : vector<8x32xf32>
    %cst_129 = arith.constant dense<0.000000e+00> : vector<8xf32>
    %455 = vector.multi_reduction <add>, %454, %cst_129 [1] : vector<8x32xf32> to vector<8xf32>
    %456 = vector.shape_cast %455 : vector<8xf32> to vector<8x1xf32>
    %cst_130 = arith.constant 3.200000e+01 : f32
    %457 = vector.broadcast %cst_130 : f32 to vector<8x1xf32>
    %458 = arith.divf %456, %457 : vector<8x1xf32>
    %459 = vector.broadcast %451 : vector<8x1xf32> to vector<8x32xf32>
    %460 = arith.subf %445, %459 : vector<8x32xf32>
    %cst_131 = arith.constant 9.99999974E-6 : f32
    %461 = vector.broadcast %cst_131 : f32 to vector<8x1xf32>
    %462 = arith.addf %458, %461 : vector<8x1xf32>
    %463 = math.rsqrt %462 : vector<8x1xf32>
    %464 = vector.broadcast %463 : vector<8x1xf32> to vector<8x32xf32>
    %465 = arith.mulf %460, %464 : vector<8x32xf32>
    %466 = vector.broadcast %446 : vector<1x32xf32> to vector<8x32xf32>
    %467 = arith.mulf %465, %466 : vector<8x32xf32>
    %468 = vector.broadcast %447 : vector<1x32xf32> to vector<8x32xf32>
    %469 = arith.addf %467, %468 : vector<8x32xf32>
    %cst_132 = arith.constant 5.000000e-01 : f32
    %470 = vector.broadcast %cst_132 : f32 to vector<8x32xf32>
    %471 = arith.mulf %470, %469 : vector<8x32xf32>
    %cst_133 = arith.constant 0.707106769 : f32
    %472 = vector.broadcast %cst_133 : f32 to vector<8x32xf32>
    %473 = arith.mulf %469, %472 : vector<8x32xf32>
    %474 = math.absf %473 : vector<8x32xf32>
    %cst_134 = arith.constant 0.327591091 : f32
    %475 = vector.broadcast %cst_134 : f32 to vector<8x32xf32>
    %476 = arith.mulf %475, %474 : vector<8x32xf32>
    %cst_135 = arith.constant 1.000000e+00 : f32
    %477 = vector.broadcast %cst_135 : f32 to vector<8x32xf32>
    %478 = arith.addf %477, %476 : vector<8x32xf32>
    %cst_136 = arith.constant 1.000000e+00 : f32
    %479 = vector.broadcast %cst_136 : f32 to vector<8x32xf32>
    %480 = arith.divf %479, %478 : vector<8x32xf32>
    %cst_137 = arith.constant 1.06140542 : f32
    %481 = vector.broadcast %cst_137 : f32 to vector<8x32xf32>
    %482 = arith.mulf %481, %480 : vector<8x32xf32>
    %cst_138 = arith.constant -1.45315206 : f32
    %483 = vector.broadcast %cst_138 : f32 to vector<8x32xf32>
    %484 = arith.addf %482, %483 : vector<8x32xf32>
    %485 = arith.mulf %484, %480 : vector<8x32xf32>
    %cst_139 = arith.constant 1.42141378 : f32
    %486 = vector.broadcast %cst_139 : f32 to vector<8x32xf32>
    %487 = arith.addf %485, %486 : vector<8x32xf32>
    %488 = arith.mulf %487, %480 : vector<8x32xf32>
    %cst_140 = arith.constant -0.284496725 : f32
    %489 = vector.broadcast %cst_140 : f32 to vector<8x32xf32>
    %490 = arith.addf %488, %489 : vector<8x32xf32>
    %491 = arith.mulf %490, %480 : vector<8x32xf32>
    %cst_141 = arith.constant 0.254829586 : f32
    %492 = vector.broadcast %cst_141 : f32 to vector<8x32xf32>
    %493 = arith.addf %491, %492 : vector<8x32xf32>
    %494 = arith.mulf %493, %480 : vector<8x32xf32>
    %cst_142 = arith.constant 0.000000e+00 : f32
    %495 = vector.broadcast %cst_142 : f32 to vector<8x32xf32>
    %496 = arith.subf %495, %474 : vector<8x32xf32>
    %497 = arith.mulf %496, %474 : vector<8x32xf32>
    %498 = math.exp %497 : vector<8x32xf32>
    %499 = arith.mulf %494, %498 : vector<8x32xf32>
    %cst_143 = arith.constant 1.000000e+00 : f32
    %500 = vector.broadcast %cst_143 : f32 to vector<8x32xf32>
    %501 = arith.subf %500, %499 : vector<8x32xf32>
    %cst_144 = arith.constant 0.000000e+00 : f32
    %502 = vector.broadcast %cst_144 : f32 to vector<8x32xf32>
    %503 = arith.cmpf oge, %473, %502 : vector<8x32xf32>
    %cst_145 = arith.constant 0.000000e+00 : f32
    %504 = vector.broadcast %cst_145 : f32 to vector<8x32xf32>
    %505 = arith.subf %504, %501 : vector<8x32xf32>
    %506 = arith.select %503, %501, %505 : vector<8x32xi1>, vector<8x32xf32>
    %cst_146 = arith.constant 1.000000e+00 : f32
    %507 = vector.broadcast %cst_146 : f32 to vector<8x32xf32>
    %508 = arith.addf %507, %506 : vector<8x32xf32>
    %509 = arith.mulf %471, %508 : vector<8x32xf32>
    %c0_147 = arith.constant 0 : index
    %c0_148 = arith.constant 0 : index
    %510 = vector.load %arg6[%c0_147, %c0_148] : memref<32x32xf32, #tpu.memory_space<vmem>>, vector<32x32xf32>
    %cst_149 = arith.constant dense<0.000000e+00> : vector<8x32xf32>
    %511 = tpu.matmul %509, %510, %cst_149 {dimension_numbers = #tpu.dot_dimension_numbers<[1], [0], [0], [1], [0, 0, 1, 1], [], []>} : vector<8x32xf32>, vector<32x32xf32>, vector<8x32xf32> -> vector<8x32xf32>
    %512 = vector.extract_strided_slice %2 {offsets = [10, 0], sizes = [1, 32], strides = [1, 1]} : vector<14x32xf32> to vector<1x32xf32>
    %513 = vector.broadcast %512 : vector<1x32xf32> to vector<8x32xf32>
    %514 = arith.addf %511, %513 : vector<8x32xf32>
    %515 = arith.negf %514 : vector<8x32xf32>
    %516 = math.exp %515 : vector<8x32xf32>
    %cst_150 = arith.constant 1.000000e+00 : f32
    %517 = vector.broadcast %cst_150 : f32 to vector<8x32xf32>
    %518 = arith.addf %517, %516 : vector<8x32xf32>
    %519 = arith.divf %517, %518 : vector<8x32xf32>
    %cst_151 = arith.constant 1.000000e+00 : f32
    %520 = vector.broadcast %cst_151 : f32 to vector<8x32xf32>
    %521 = arith.subf %520, %519 : vector<8x32xf32>
    %522 = arith.mulf %0, %521 : vector<8x32xf32>
    %523 = arith.mulf %441, %519 : vector<8x32xf32>
    %524 = arith.addf %522, %523 : vector<8x32xf32>
    %525 = vector.extract_strided_slice %2 {offsets = [12, 0], sizes = [1, 32], strides = [1, 1]} : vector<14x32xf32> to vector<1x32xf32>
    %526 = vector.extract_strided_slice %2 {offsets = [13, 0], sizes = [1, 32], strides = [1, 1]} : vector<14x32xf32> to vector<1x32xf32>
    %cst_152 = arith.constant dense<0.000000e+00> : vector<8xf32>
    %527 = vector.multi_reduction <add>, %524, %cst_152 [1] : vector<8x32xf32> to vector<8xf32>
    %528 = vector.shape_cast %527 : vector<8xf32> to vector<8x1xf32>
    %cst_153 = arith.constant 3.200000e+01 : f32
    %529 = vector.broadcast %cst_153 : f32 to vector<8x1xf32>
    %530 = arith.divf %528, %529 : vector<8x1xf32>
    %531 = vector.broadcast %530 : vector<8x1xf32> to vector<8x32xf32>
    %532 = arith.subf %524, %531 : vector<8x32xf32>
    %533 = arith.mulf %532, %532 : vector<8x32xf32>
    %cst_154 = arith.constant dense<0.000000e+00> : vector<8xf32>
    %534 = vector.multi_reduction <add>, %533, %cst_154 [1] : vector<8x32xf32> to vector<8xf32>
    %535 = vector.shape_cast %534 : vector<8xf32> to vector<8x1xf32>
    %cst_155 = arith.constant 3.200000e+01 : f32
    %536 = vector.broadcast %cst_155 : f32 to vector<8x1xf32>
    %537 = arith.divf %535, %536 : vector<8x1xf32>
    %538 = vector.broadcast %530 : vector<8x1xf32> to vector<8x32xf32>
    %539 = arith.subf %524, %538 : vector<8x32xf32>
    %cst_156 = arith.constant 9.99999974E-6 : f32
    %540 = vector.broadcast %cst_156 : f32 to vector<8x1xf32>
    %541 = arith.addf %537, %540 : vector<8x1xf32>
    %542 = math.rsqrt %541 : vector<8x1xf32>
    %543 = vector.broadcast %542 : vector<8x1xf32> to vector<8x32xf32>
    %544 = arith.mulf %539, %543 : vector<8x32xf32>
    %545 = vector.broadcast %525 : vector<1x32xf32> to vector<8x32xf32>
    %546 = arith.mulf %544, %545 : vector<8x32xf32>
    %547 = vector.broadcast %526 : vector<1x32xf32> to vector<8x32xf32>
    %548 = arith.addf %546, %547 : vector<8x32xf32>
    %c0_157 = arith.constant 0 : index
    %c0_158 = arith.constant 0 : index
    %549 = vector.load %arg8[%c0_157, %c0_158] : memref<8x32xf32, #tpu.memory_space<vmem>>, vector<8x32xf32>
    tpu.vector_store %arg8[%c0_157, %c0_158], %548 {strides = array<i32>} : memref<8x32xf32, #tpu.memory_space<vmem>>, vector<8x32xf32>,
    return
  }
  func.func @transform_0(%arg0: i32) -> (i32, i32) {
    %c0_i32 = arith.constant 0 : i32
    %c0_i32_0 = arith.constant 0 : i32
    return %arg0, %c0_i32 : i32, i32
  }
  func.func @transform_1(%arg0: i32) -> (i32, i32) {
    %c0_i32 = arith.constant 0 : i32
    %c0_i32_0 = arith.constant 0 : i32
    %c0_i32_1 = arith.constant 0 : i32
    return %c0_i32, %c0_i32_0 : i32, i32
  }
  func.func @transform_2(%arg0: i32) -> (i32, i32) {
    %c0_i32 = arith.constant 0 : i32
    %c0_i32_0 = arith.constant 0 : i32
    %c0_i32_1 = arith.constant 0 : i32
    return %c0_i32, %c0_i32_0 : i32, i32
  }
  func.func @transform_3(%arg0: i32) -> (i32, i32) {
    %c0_i32 = arith.constant 0 : i32
    %c0_i32_0 = arith.constant 0 : i32
    %c0_i32_1 = arith.constant 0 : i32
    return %c0_i32, %c0_i32_0 : i32, i32
  }
  func.func @transform_4(%arg0: i32) -> (i32, i32) {
    %c0_i32 = arith.constant 0 : i32
    %c0_i32_0 = arith.constant 0 : i32
    %c0_i32_1 = arith.constant 0 : i32
    return %c0_i32, %c0_i32_0 : i32, i32
  }
  func.func @transform_5(%arg0: i32) -> (i32, i32) {
    %c0_i32 = arith.constant 0 : i32
    %c0_i32_0 = arith.constant 0 : i32
    %c0_i32_1 = arith.constant 0 : i32
    return %c0_i32, %c0_i32_0 : i32, i32
  }
  func.func @transform_6(%arg0: i32) -> (i32, i32) {
    %c0_i32 = arith.constant 0 : i32
    %c0_i32_0 = arith.constant 0 : i32
    %c0_i32_1 = arith.constant 0 : i32
    return %c0_i32, %c0_i32_0 : i32, i32
  }
  func.func @transform_7(%arg0: i32) -> (i32, i32) {
    %c0_i32 = arith.constant 0 : i32
    %c0_i32_0 = arith.constant 0 : i32
    return %arg0, %c0_i32 : i32, i32
  }
  func.func @transform_8(%arg0: i32) -> (i32, i32) {
    %c0_i32 = arith.constant 0 : i32
    %c0_i32_0 = arith.constant 0 : i32
    return %arg0, %c0_i32 : i32, i32
  }
}

</mosaic_0001>

<llo_original>
// kernel: enhanced_rag_forward.1
$region0: #{enhanced_rag_forward.1}
  #allocation0 [shape = 'u32[]', space=smem, size = 0x4, offset = 0x4, fixed_abs, tag = 'smem constant byte address 0x4 - core index']
  #allocation1 [shape = 'u32[144,128]{1,0:T(1,128)}', space=vmem, size = 0x12000, scoped, tag = 'internal scratch']
  %s0 = inlined_call_operand.vmem [shape: f32[16,32], index: 0, kind: input, shape index: {}]
  %s1 = inlined_call_operand.vmem [shape: f32[64,32], index: 1, kind: input, shape index: {}]
  %s2 = inlined_call_operand.vmem [shape: f32[32,96], index: 2, kind: input, shape index: {}]
  %s3 = inlined_call_operand.vmem [shape: f32[32,32], index: 3, kind: input, shape index: {}]
  %s4 = inlined_call_operand.vmem [shape: f32[32,64], index: 4, kind: input, shape index: {}]
  %s5 = inlined_call_operand.vmem [shape: f32[32,32], index: 5, kind: input, shape index: {}]
  %s6 = inlined_call_operand.vmem [shape: f32[14,32], index: 6, kind: input, shape index: {}]
  %s7 = inlined_call_operand.hbm [shape: f32[16,32], index: 7, kind: output, shape index: {0}]
  %s8 = inlined_call_operand.vmem [shape: f32[16,16], index: 8, kind: output, shape index: {1}]
  %9 = xla_tuple %s7, %s8
  %s10 = sld [smem:[#allocation0]]
  $region69: #{enhanced_rag_forward.1} parent=0
    _
  %s12 = ssub.s32 1, %s10
  %s13 = scalar_select 0, %s12, %s10
  $region1: #{enhanced_rag_forward.1} parent=0
    #allocation2 [shape = 'u8[8192]{0}', space=vmem, size = 0x2000, scoped, tag = 'output window, operand 0']
    #allocation3 [shape = 's32[2]{0}', space=sflag, size = 0x8, scoped, tag = 'scoped memory for enhanced_rag_forward.1']
    %14 = vsyncpa [#allocation3], 0
    %s15 = scalar_lea.sflag [#allocation3], 1
    %16 = vsyncpa %s15, 0
    loop: start=0, step=1, limit=4
    $region2: #{enhanced_rag_forward.1} parent=1 // loop_pre_header
      _
    $region3: #{enhanced_rag_forward.1} parent=1 // loop_header
      %s18 = sphi 0, %s22
      %p19 = scmp.ge.s32.totalorder %s18, 4
      %s28 = sphi 0, %s30
      %s31 = sphi 0, %s28
      %s32 = sphi 0, %s31
      %s48 = sphi 0, %s32
      %s52 = sphi 0, %s52
      %s54 = sphi 0, %s52
      %s55 = sphi 0, %s54
      %s69 = sphi 0, %s55
      %s73 = sphi 0, %s73
      %s75 = sphi 0, %s73
      %s76 = sphi 0, %s75
      %s90 = sphi 0, %s76
      %s94 = sphi 0, %s94
      %s96 = sphi 0, %s94
      %s97 = sphi 0, %s96
      %s111 = sphi 0, %s97
      %s115 = sphi 0, %s115
      %s117 = sphi 0, %s115
      %s118 = sphi 0, %s117
      %s132 = sphi 0, %s118
      %s136 = sphi 0, %s136
      %s138 = sphi 0, %s136
      %s139 = sphi 0, %s138
      %s153 = sphi 0, %s139
      %s157 = sphi 0, %s157
      %s159 = sphi 0, %s157
      %s160 = sphi 0, %s159
      %s174 = sphi 0, %s160
      %s180 = sphi 0, %s182
      %s183 = sphi 0, %s180
      %s184 = sphi 0, %s183
      %s200 = sphi 0, %s184
      %s206 = sphi 0, %s208
      %s209 = sphi 0, %s206
      %s210 = sphi 0, %s209
      %s226 = sphi 0, %s210
    $region4: #{enhanced_rag_forward.1} parent=1 // loop_header_branch
      %21 = sbr.rel (%p19) target = $region8
    $region5: #{enhanced_rag_forward.1} parent=1 // loop_body
      %s23 = ssub.s32 %s18, 1
      %s24 = ssub.s32 %s18, 2
      %s25 = sadd.s32 %s18, 1
      %s26 = ssub.s32 %s18, %s25
      %p27 = scmp.eq.s32.totalorder %s26, 0
      %s29 = sadd.s32 %s28, 1
      %s30 = scalar_select %p27, %s28, %s29
      %p33 = pneg %p27
      %p34 = scmp.eq.s32.totalorder %s18, 1
      %p35 = por %p33, %p34
      %p36 = scmp.ne.s32.totalorder %s28, %s31
      %p37 = scmp.eq.s32.totalorder %s18, 0
      %p38 = por %p36, %p37
      %p39 = scmp.ne.s32.totalorder %s28, %s31
      %p40 = scmp.eq.s32.totalorder %s23, 1
      %p41 = por %p39, %p40
      %p42 = scmp.ne.s32.totalorder %s31, %s32
      %p43 = scmp.eq.s32.totalorder %s23, 0
      %p44 = por %p42, %p43
      %p45 = scmp.ne.s32.totalorder %s31, %s32
      %p46 = scmp.eq.s32.totalorder %s24, 1
      %p47 = por %p45, %p46
      %p49 = scmp.ne.s32.totalorder %s32, %s48
      %p50 = scmp.eq.s32.totalorder %s24, 0
      %p51 = por %p49, %p50
      %s53 = sadd.s32 %s52, 1
      %p56 = scmp.eq.s32.totalorder %s18, 1
      %p57 = scmp.ne.s32.totalorder %s52, %s54
      %p58 = scmp.eq.s32.totalorder %s18, 0
      %p59 = por %p57, %p58
      %p60 = scmp.ne.s32.totalorder %s52, %s54
      %p61 = scmp.eq.s32.totalorder %s23, 1
      %p62 = por %p60, %p61
      %p63 = scmp.ne.s32.totalorder %s54, %s55
      %p64 = scmp.eq.s32.totalorder %s23, 0
      %p65 = por %p63, %p64
      %p66 = scmp.ne.s32.totalorder %s54, %s55
      %p67 = scmp.eq.s32.totalorder %s24, 1
      %p68 = por %p66, %p67
      %p70 = scmp.ne.s32.totalorder %s55, %s69
      %p71 = scmp.eq.s32.totalorder %s24, 0
      %p72 = por %p70, %p71
      %s74 = sadd.s32 %s73, 1
      %p77 = scmp.eq.s32.totalorder %s18, 1
      %p78 = scmp.ne.s32.totalorder %s73, %s75
      %p79 = scmp.eq.s32.totalorder %s18, 0
      %p80 = por %p78, %p79
      %p81 = scmp.ne.s32.totalorder %s73, %s75
      %p82 = scmp.eq.s32.totalorder %s23, 1
      %p83 = por %p81, %p82
      %p84 = scmp.ne.s32.totalorder %s75, %s76
      %p85 = scmp.eq.s32.totalorder %s23, 0
      %p86 = por %p84, %p85
      %p87 = scmp.ne.s32.totalorder %s75, %s76
      %p88 = scmp.eq.s32.totalorder %s24, 1
      %p89 = por %p87, %p88
      %p91 = scmp.ne.s32.totalorder %s76, %s90
      %p92 = scmp.eq.s32.totalorder %s24, 0
      %p93 = por %p91, %p92
      %s95 = sadd.s32 %s94, 1
      %p98 = scmp.eq.s32.totalorder %s18, 1
      %p99 = scmp.ne.s32.totalorder %s94, %s96
      %p100 = scmp.eq.s32.totalorder %s18, 0
      %p101 = por %p99, %p100
      %p102 = scmp.ne.s32.totalorder %s94, %s96
      %p103 = scmp.eq.s32.totalorder %s23, 1
      %p104 = por %p102, %p103
      %p105 = scmp.ne.s32.totalorder %s96, %s97
      %p106 = scmp.eq.s32.totalorder %s23, 0
      %p107 = por %p105, %p106
      %p108 = scmp.ne.s32.totalorder %s96, %s97
      %p109 = scmp.eq.s32.totalorder %s24, 1
      %p110 = por %p108, %p109
      %p112 = scmp.ne.s32.totalorder %s97, %s111
      %p113 = scmp.eq.s32.totalorder %s24, 0
      %p114 = por %p112, %p113
      %s116 = sadd.s32 %s115, 1
      %p119 = scmp.eq.s32.totalorder %s18, 1
      %p120 = scmp.ne.s32.totalorder %s115, %s117
      %p121 = scmp.eq.s32.totalorder %s18, 0
      %p122 = por %p120, %p121
      %p123 = scmp.ne.s32.totalorder %s115, %s117
      %p124 = scmp.eq.s32.totalorder %s23, 1
      %p125 = por %p123, %p124
      %p126 = scmp.ne.s32.totalorder %s117, %s118
      %p127 = scmp.eq.s32.totalorder %s23, 0
      %p128 = por %p126, %p127
      %p129 = scmp.ne.s32.totalorder %s117, %s118
      %p130 = scmp.eq.s32.totalorder %s24, 1
      %p131 = por %p129, %p130
      %p133 = scmp.ne.s32.totalorder %s118, %s132
      %p134 = scmp.eq.s32.totalorder %s24, 0
      %p135 = por %p133, %p134
      %s137 = sadd.s32 %s136, 1
      %p140 = scmp.eq.s32.totalorder %s18, 1
      %p141 = scmp.ne.s32.totalorder %s136, %s138
      %p142 = scmp.eq.s32.totalorder %s18, 0
      %p143 = por %p141, %p142
      %p144 = scmp.ne.s32.totalorder %s136, %s138
      %p145 = scmp.eq.s32.totalorder %s23, 1
      %p146 = por %p144, %p145
      %p147 = scmp.ne.s32.totalorder %s138, %s139
      %p148 = scmp.eq.s32.totalorder %s23, 0
      %p149 = por %p147, %p148
      %p150 = scmp.ne.s32.totalorder %s138, %s139
      %p151 = scmp.eq.s32.totalorder %s24, 1
      %p152 = por %p150, %p151
      %p154 = scmp.ne.s32.totalorder %s139, %s153
      %p155 = scmp.eq.s32.totalorder %s24, 0
      %p156 = por %p154, %p155
      %s158 = sadd.s32 %s157, 1
      %p161 = scmp.eq.s32.totalorder %s18, 1
      %p162 = scmp.ne.s32.totalorder %s157, %s159
      %p163 = scmp.eq.s32.totalorder %s18, 0
      %p164 = por %p162, %p163
      %p165 = scmp.ne.s32.totalorder %s157, %s159
      %p166 = scmp.eq.s32.totalorder %s23, 1
      %p167 = por %p165, %p166
      %p168 = scmp.ne.s32.totalorder %s159, %s160
      %p169 = scmp.eq.s32.totalorder %s23, 0
      %p170 = por %p168, %p169
      %p171 = scmp.ne.s32.totalorder %s159, %s160
      %p172 = scmp.eq.s32.totalorder %s24, 1
      %p173 = por %p171, %p172
      %p175 = scmp.ne.s32.totalorder %s160, %s174
      %p176 = scmp.eq.s32.totalorder %s24, 0
      %p177 = por %p175, %p176
      %s178 = ssub.s32 %s18, %s25
      %p179 = scmp.eq.s32.totalorder %s178, 0
      %s181 = sadd.s32 %s180, 1
      %s182 = scalar_select %p179, %s180, %s181
      %p185 = pneg %p179
      %p186 = scmp.eq.s32.totalorder %s18, 1
      %p187 = por %p185, %p186
      %p188 = scmp.ne.s32.totalorder %s180, %s183
      %p189 = scmp.eq.s32.totalorder %s18, 0
      %p190 = por %p188, %p189
      %p191 = scmp.ne.s32.totalorder %s180, %s183
      %p192 = scmp.eq.s32.totalorder %s23, 1
      %p193 = por %p191, %p192
      %p194 = scmp.ne.s32.totalorder %s183, %s184
      %p195 = scmp.eq.s32.totalorder %s23, 0
      %p196 = por %p194, %p195
      %p197 = scmp.ne.s32.totalorder %s183, %s184
      %p198 = scmp.eq.s32.totalorder %s24, 1
      %p199 = por %p197, %p198
      %p201 = scmp.ne.s32.totalorder %s184, %s200
      %p202 = scmp.eq.s32.totalorder %s24, 0
      %p203 = por %p201, %p202
      %s204 = ssub.s32 %s18, %s25
      %p205 = scmp.eq.s32.totalorder %s204, 0
      %s207 = sadd.s32 %s206, 1
      %s208 = scalar_select %p205, %s206, %s207
      %p211 = pneg %p205
      %p212 = scmp.eq.s32.totalorder %s18, 1
      %p213 = por %p211, %p212
      %p214 = scmp.ne.s32.totalorder %s206, %s209
      %p215 = scmp.eq.s32.totalorder %s18, 0
      %p216 = por %p214, %p215
      %p217 = scmp.ne.s32.totalorder %s206, %s209
      %p218 = scmp.eq.s32.totalorder %s23, 1
      %p219 = por %p217, %p218
      %p220 = scmp.ne.s32.totalorder %s209, %s210
      %p221 = scmp.eq.s32.totalorder %s23, 0
      %p222 = por %p220, %p221
      %p223 = scmp.ne.s32.totalorder %s209, %s210
      %p224 = scmp.eq.s32.totalorder %s24, 1
      %p225 = por %p223, %p224
      %p227 = scmp.ne.s32.totalorder %s210, %s226
      %p228 = scmp.eq.s32.totalorder %s24, 0
      %p229 = por %p227, %p228
      %p230 = scmp.le.s32.totalorder 1, %s18
      %p231 = scmp.lt.s32.totalorder %s18, 3
      %p232 = pnand %p230, %p231
      %p233 = pneg %p232
      // Predicated region
      $region9: #{enhanced_rag_forward.1} parent=5 // pred_check
        _
      $region10: #{enhanced_rag_forward.1} parent=5 // pred_check_branch
        %235 = sbr.rel (%p232) target = $region12
      $region11: #{enhanced_rag_forward.1} parent=5 // pred_region
        %s236 = ssub.s32 %s18, 1
        // Predicated region
        $region13: #{enhanced_rag_forward.1} parent=11 // pred_check
          %p237 = pneg %p65
        $region14: #{enhanced_rag_forward.1} parent=11 // pred_check_branch
          %239 = sbr.rel (%p237) target = $region16
        $region15: #{enhanced_rag_forward.1} parent=11 // pred_region
          _
        $region16: #{enhanced_rag_forward.1} parent=11 // pred_fallthru
          _
        // Predicated region
        $region17: #{enhanced_rag_forward.1} parent=11 // pred_check
          %p240 = pneg %p86
        $region18: #{enhanced_rag_forward.1} parent=11 // pred_check_branch
          %242 = sbr.rel (%p240) target = $region20
        $region19: #{enhanced_rag_forward.1} parent=11 // pred_region
          _
        $region20: #{enhanced_rag_forward.1} parent=11 // pred_fallthru
          _
        // Predicated region
        $region21: #{enhanced_rag_forward.1} parent=11 // pred_check
          %p243 = pneg %p107
        $region22: #{enhanced_rag_forward.1} parent=11 // pred_check_branch
          %245 = sbr.rel (%p243) target = $region24
        $region23: #{enhanced_rag_forward.1} parent=11 // pred_region
          _
        $region24: #{enhanced_rag_forward.1} parent=11 // pred_fallthru
          _
        // Predicated region
        $region25: #{enhanced_rag_forward.1} parent=11 // pred_check
          %p246 = pneg %p128
        $region26: #{enhanced_rag_forward.1} parent=11 // pred_check_branch
          %248 = sbr.rel (%p246) target = $region28
        $region27: #{enhanced_rag_forward.1} parent=11 // pred_region
          _
        $region28: #{enhanced_rag_forward.1} parent=11 // pred_fallthru
          _
        // Predicated region
        $region29: #{enhanced_rag_forward.1} parent=11 // pred_check
          %p249 = pneg %p149
        $region30: #{enhanced_rag_forward.1} parent=11 // pred_check_branch
          %251 = sbr.rel (%p249) target = $region32
        $region31: #{enhanced_rag_forward.1} parent=11 // pred_region
          _
        $region32: #{enhanced_rag_forward.1} parent=11 // pred_fallthru
          _
        // Predicated region
        $region33: #{enhanced_rag_forward.1} parent=11 // pred_check
          %p252 = pneg %p170
        $region34: #{enhanced_rag_forward.1} parent=11 // pred_check_branch
          %254 = sbr.rel (%p252) target = $region36
        $region35: #{enhanced_rag_forward.1} parent=11 // pred_region
          _
        $region36: #{enhanced_rag_forward.1} parent=11 // pred_fallthru
          _
      $region12: #{enhanced_rag_forward.1} parent=5 // pred_fallthru
        _
      %p255 = scmp.lt.s32.totalorder %s18, 2
      // Predicated region
      $region37: #{enhanced_rag_forward.1} parent=5 // pred_check
        %p256 = pneg %p255
      $region38: #{enhanced_rag_forward.1} parent=5 // pred_check_branch
        %258 = sbr.rel (%p256) target = $region40
      $region39: #{enhanced_rag_forward.1} parent=5 // pred_region
        // Predicated region
        $region41: #{enhanced_rag_forward.1} parent=39 // pred_check
          %p259 = pneg %p38
        $region42: #{enhanced_rag_forward.1} parent=39 // pred_check_branch
          %261 = sbr.rel (%p259) target = $region44
        $region43: #{enhanced_rag_forward.1} parent=39 // pred_region
          %p262 = scmp.lt.s32.totalorder %s18, 1
          %s263 = scalar_select %p262, %s18, 1
          %s264 = smul.addr %s263, 8
          %s265 = scalar_lea.vmem %s0, %s264
        $region44: #{enhanced_rag_forward.1} parent=39 // pred_fallthru
          _
      $region40: #{enhanced_rag_forward.1} parent=5 // pred_fallthru
        _
      %p266 = scmp.le.s32.totalorder 1, %s18
      %p267 = scmp.lt.s32.totalorder %s18, 3
      %p268 = pnand %p266, %p267
      %p269 = pneg %p268
      // Predicated region
      $region45: #{enhanced_rag_forward.1} parent=5 // pred_check
        _
      $region46: #{enhanced_rag_forward.1} parent=5 // pred_check_branch
        %271 = sbr.rel (%p268) target = $region48
      $region47: #{enhanced_rag_forward.1} parent=5 // pred_region
        %s272 = ssub.s32 %s18, 1
        %p273 = scmp.lt.s32.totalorder %s23, 1
        %s274 = scalar_select %p273, %s23, 1
        %s275 = smul.addr %s274, 8
        %s276 = scalar_lea.vmem %s0, %s275
        %p277 = pneg %p44
        %p278 = pneg %p41
        %p279 = pneg %p65
        %p280 = pneg %p62
        %p281 = pneg %p86
        %p282 = pneg %p83
        %p283 = pneg %p107
        %p284 = pneg %p104
        %p285 = pneg %p128
        %p286 = pneg %p125
        %p287 = pneg %p149
        %p288 = pneg %p146
        %p289 = pneg %p170
        %p290 = pneg %p167
        %p291 = pneg %p196
        %p292 = pneg %p193
        %s293 = sand.u32 %s183, 1
        %s294 = scalar_lea.sflag [#allocation3], %s293
        %s295 = sand.u32 %s183, 1
        %s296 = smul.addr %s295, 8
        %s297 = scalar_lea.vmem [#allocation2], %s296
        %p298 = pneg %p222
        %p299 = pneg %p219
        %p300 = scmp.lt.s32.totalorder %s23, 1
        %s301 = scalar_select %p300, %s23, 1
        %s302 = smul.addr %s301, 8
        %s303 = scalar_lea.vmem %s8, %s302
        %p304 = scmp.lt.s32.totalorder %s23, 1
        %s305 = scalar_select %p304, %s23, 1
        %s306 = smul.addr %s305, 8
        %s307 = scalar_lea.vmem %s0, %s306
        %p308 = scmp.lt.s32.totalorder %s23, 1
        %s309 = scalar_select %p308, %s23, 1
        %s310 = smul.addr %s309, 8
        %s311 = scalar_lea.vmem %s8, %s310
        %v312 = vld [vmem:[%s307] sm:$0xff]
        %v313 = vld [vmem:[%s1] sm:$0xff]
        %v314 = vld [vmem:[%s1 + $0x8] sm:$0xff]
        %v315 = vld [vmem:[%s1 + $0x10] sm:$0xff]
        %v316 = vld [vmem:[%s1 + $0x18] sm:$0xff]
        %v317 = vld [vmem:[%s1 + $0x20] sm:$0xff]
        %v318 = vld [vmem:[%s1 + $0x28] sm:$0xff]
        %v319 = vld [vmem:[%s1 + $0x30] sm:$0xff]
        %v320 = vld [vmem:[%s1 + $0x38] sm:$0xff]
        %v321 = vld [vmem:[%s6] sm:$0xff]
        %v322 = vld [vmem:[%s6 + $0x8] sm:$0x3f]
        %v323 = vld [vmem:[%s2] sm:$0xff]
        %v324 = vld [vmem:[%s2 + $0x8] sm:$0xff]
        %v325 = vld [vmem:[%s2 + $0x10] sm:$0xff]
        %v326 = vld [vmem:[%s2 + $0x18] sm:$0xff]
        %vm327 = vcmask 261120
        %v329 = vsel %vm327, %v312, 0
        %331 = vmatprep.subr.mxu0 0.0
        %332 = vmatpush1.msra.mxu0 %v323
        %333 = vmatprep.subr.mxu0 0.0
        %334 = vmatpush1.msra.mxu0 %v324
        %335 = vmatprep.subr.mxu0 0.0
        %336 = vmatpush1.msra.mxu0 %v325
        %337 = vmatprep.subr.mxu0 0.0
        %338 = vmatpush1.msra.mxu0 %v326
        %339 = vmatprep.subr.mxu0 0.0
        %340 = vmatpush1.msra.mxu0 0.0
        %341 = vmatprep.subr.mxu0 0.0
        %342 = vmatpush1.msra.mxu0 0.0
        %343 = vmatprep.subr.mxu0 0.0
        %344 = vmatpush1.msra.mxu0 0.0
        %345 = vmatprep.subr.mxu0 0.0
        %346 = vmatpush1.msra.mxu0 0.0
        %347 = vmatprep.subr.mxu0 0.0
        %348 = vmatpush1.msra.mxu0 0.0
        %349 = vmatprep.subr.mxu0 0.0
        %350 = vmatpush1.msra.mxu0 0.0
        %351 = vmatprep.subr.mxu0 0.0
        %352 = vmatpush1.msra.mxu0 0.0
        %353 = vmatprep.subr.mxu0 0.0
        %354 = vmatpush1.msra.mxu0 0.0
        %355 = vmatprep.subr.mxu0 0.0
        %356 = vmatpush1.msra.mxu0 0.0
        %357 = vmatprep.subr.mxu0 0.0
        %358 = vmatpush1.msra.mxu0 0.0
        %359 = vmatprep.subr.mxu0 0.0
        %360 = vmatpush1.msra.mxu0 0.0
        %361 = vmatprep.subr.mxu0 0.0
        %362 = vmatpush1.msra.mxu0 0.0
        %363 = vmatprep.subr.mxu0 0.0
        %364 = vmatpush1.msra.mxu0 0.0
        %365 = vmatprep.subr.mxu0 0.0
        %366 = vmatpush1.msra.mxu0 0.0
        %367 = vmatprep.subr.mxu0 0.0
        %368 = vmatpush1.msra.mxu0 0.0
        %369 = vmatprep.subr.mxu0 0.0
        %370 = vmatpush1.msra.mxu0 0.0
        %371 = vmatprep.subr.mxu0 0.0
        %372 = vmatpush1.msra.mxu0 0.0
        %373 = vmatprep.subr.mxu0 0.0
        %374 = vmatpush1.msra.mxu0 0.0
        %375 = vmatprep.subr.mxu0 0.0
        %376 = vmatpush1.msra.mxu0 0.0
        %377 = vmatprep.subr.mxu0 0.0
        %378 = vmatpush1.msra.mxu0 0.0
        %379 = vmatprep.subr.mxu0 0.0
        %380 = vmatpush1.msra.mxu0 0.0
        %381 = vmatprep.subr.mxu0 0.0
        %382 = vmatpush1.msra.mxu0 0.0
        %383 = vmatprep.subr.mxu0 0.0
        %384 = vmatpush1.msra.mxu0 0.0
        %385 = vmatprep.subr.mxu0 0.0
        %386 = vmatpush1.msra.mxu0 0.0
        %387 = vmatprep.subr.mxu0 0.0
        %388 = vmatpush1.msra.mxu0 0.0
        %389 = vmatprep.subr.mxu0 0.0
        %390 = vmatpush1.msra.mxu0 0.0
        %391 = vmatprep.subr.mxu0 0.0
        %392 = vmatpush1.msra.mxu0 0.0
        %393 = vmatprep.subr.mxu0 0.0
        %394 = vmatpush1.msra.mxu0 0.0
        %395 = vmatprep.mubr.f32.mxu0 0.0
        %396 = vmatmul.mubr.f32.gmra.mrb[0].mxu0 %v329
        %v397 = vpop.f32.mrb[0].mxu0
        %v398 = vadd.f32 0.0, %v397
        %v399 = vpop.f32.mrb[0].mxu0
        %400 = vdwg.mxu0
        %v401 = vlaneseq
        %v402 = vshrl.u32 %v401, 7
        %v403 = vsub.s32 0, %v402
        %v404 = vrot.slane %v321, %v403
        %v405 = vadd.f32 %v398, %v404
        %v406 = vsel %vm327, %v405, 0.0
        %407 = vadd.xlane.f32.xlu0 %v406
        %v408 = vpop.xlane.xlu0 %407
        %v409 = vrcp.pop 32.0
        %v410 = vmul.f32 %v408, %v409
        %v411 = vsub.f32 %v405, %v410
        %v412 = vmul.f32 %v411, %v411
        %v413 = vsel %vm327, %v412, 0.0
        %414 = vadd.xlane.f32.xlu0 %v413
        %v415 = vpop.xlane.xlu0 %414
        %v416 = vmul.f32 %v415, %v409
        %v417 = vadd.f32 %v416, 1e-05
        %v418 = vrsqrt.pop %v417
        %v419 = vmul.f32 %v411, %v418
        %v420 = vlaneseq
        %v421 = vshrl.u32 %v420, 7
        %v422 = vsub.s32 1, %v421
        %v423 = vrot.slane %v321, %v422
        %v424 = vmul.f32 %v419, %v423
        %v425 = vlaneseq
        %v426 = vshrl.u32 %v425, 7
        %v427 = vsub.s32 2, %v426
        %v428 = vrot.slane %v321, %v427
        %v429 = vadd.f32 %v424, %v428
        %v430 = vlaneseq
        %v431 = vshrl.u32 %v430, 7
        %v432 = vsub.s32 3, %v431
        %v433 = vrot.slane %v321, %v432
        %435 = vrot.lane.b32.xlu0 %v433, 32
        %v436 = vpop.permute.xlu0 %435
        %v438 = vadd.f32 %v398, %v436
        %440 = vrot.lane.b32.xlu0 %v438, 96
        %v441 = vpop.permute.xlu0 %440
        %v443 = vsel %vm327, %v441, 0.0
        %444 = vadd.xlane.f32.xlu0 %v443
        %v445 = vpop.xlane.xlu0 %444
        %v446 = vmul.f32 %v445, %v409
        %v447 = vsub.f32 %v438, %v446
        %v448 = vmul.f32 %v447, %v447
        %450 = vrot.lane.b32.xlu0 %v448, 96
        %v451 = vpop.permute.xlu0 %450
        %v453 = vsel %vm327, %v451, 0.0
        %454 = vadd.xlane.f32.xlu0 %v453
        %v455 = vpop.xlane.xlu0 %454
        %v456 = vmul.f32 %v455, %v409
        %v457 = vadd.f32 %v456, 1e-05
        %v458 = vrsqrt.pop %v457
        %v459 = vmul.f32 %v447, %v458
        %v460 = vlaneseq
        %v461 = vshrl.u32 %v460, 7
        %v462 = vsub.s32 4, %v461
        %v463 = vrot.slane %v321, %v462
        %465 = vrot.lane.b32.xlu0 %v463, 32
        %v466 = vpop.permute.xlu0 %465
        %v468 = vmul.f32 %v459, %v466
        %v469 = vlaneseq
        %v470 = vshrl.u32 %v469, 7
        %v471 = vsub.s32 5, %v470
        %v472 = vrot.slane %v321, %v471
        %474 = vrot.lane.b32.xlu0 %v472, 32
        %v475 = vpop.permute.xlu0 %474
        %v477 = vadd.f32 %v468, %v475
        %v478 = vmul.f32 %v477, 0.5
        %v479 = vmul.f32 %v477, 0.70710677
        %v480 = vand.u32 2147483647, %v479
        %v481 = vmul.f32 %v480, 0.3275911
        %v482 = vadd.f32 %v481, 1.0
        %v483 = vrcp.pop %v482
        %v484 = vmul.f32 1.0, %v483
        %v485 = vmul.f32 %v484, 1.0614054
        %v486 = vadd.f32 %v485, -1.4531521
        %v487 = vmul.f32 %v486, %v484
        %v488 = vadd.f32 %v487, 1.4214138
        %v489 = vmul.f32 %v488, %v484
        %v490 = vadd.f32 %v489, -0.28449672
        %v491 = vmul.f32 %v490, %v484
        %v492 = vadd.f32 %v491, 0.2548296
        %v493 = vmul.f32 %v492, %v484
        %v494 = vsub.f32 0.0, %v480
        %v495 = vmul.f32 %v494, %v480
        %v496 = vmul.f32 %v495, 1.442695
        %v497 = vpow.pop %v496
        %v498 = vmul.f32 %v493, %v497
        %v499 = vsub.f32 1.0, %v498
        %vm500 = vcmp.ge.f32.partialorder %v479, 0.0
        %v501 = vsub.f32 0.0, %v499
        %v502 = vsel %vm500, %v499, %v501
        %v503 = vadd.f32 %v502, 1.0
        %v504 = vmul.f32 %v478, %v503
        %v505 = vld [vmem:[%s3] sm:$0xff]
        %v506 = vld [vmem:[%s3 + $0x8] sm:$0xff]
        %v507 = vld [vmem:[%s3 + $0x10] sm:$0xff]
        %v508 = vld [vmem:[%s3 + $0x18] sm:$0xff]
        %v509 = vlaneseq
        %v510 = vshrl.u32 %v509, 7
        %v511 = vsub.s32 6, %v510
        %v512 = vrot.slane %v321, %v511
        %514 = vrot.lane.b32.xlu0 %v504, 96
        %v515 = vpop.permute.xlu0 %514
        %v516 = vsel %vm327, %v515, 0
        %518 = vmatprep.subr.mxu0 0.0
        %519 = vmatpush1.msra.mxu0 %v505
        %520 = vmatprep.subr.mxu0 0.0
        %521 = vmatpush1.msra.mxu0 %v506
        %522 = vmatprep.subr.mxu0 0.0
        %523 = vmatpush1.msra.mxu0 %v507
        %524 = vmatprep.subr.mxu0 0.0
        %525 = vmatpush1.msra.mxu0 %v508
        %526 = vmatprep.subr.mxu0 0.0
        %527 = vmatpush1.msra.mxu0 0.0
        %528 = vmatprep.subr.mxu0 0.0
        %529 = vmatpush1.msra.mxu0 0.0
        %530 = vmatprep.subr.mxu0 0.0
        %531 = vmatpush1.msra.mxu0 0.0
        %532 = vmatprep.subr.mxu0 0.0
        %533 = vmatpush1.msra.mxu0 0.0
        %534 = vmatprep.subr.mxu0 0.0
        %535 = vmatpush1.msra.mxu0 0.0
        %536 = vmatprep.subr.mxu0 0.0
        %537 = vmatpush1.msra.mxu0 0.0
        %538 = vmatprep.subr.mxu0 0.0
        %539 = vmatpush1.msra.mxu0 0.0
        %540 = vmatprep.subr.mxu0 0.0
        %541 = vmatpush1.msra.mxu0 0.0
        %542 = vmatprep.subr.mxu0 0.0
        %543 = vmatpush1.msra.mxu0 0.0
        %544 = vmatprep.subr.mxu0 0.0
        %545 = vmatpush1.msra.mxu0 0.0
        %546 = vmatprep.subr.mxu0 0.0
        %547 = vmatpush1.msra.mxu0 0.0
        %548 = vmatprep.subr.mxu0 0.0
        %549 = vmatpush1.msra.mxu0 0.0
        %550 = vmatprep.subr.mxu0 0.0
        %551 = vmatpush1.msra.mxu0 0.0
        %552 = vmatprep.subr.mxu0 0.0
        %553 = vmatpush1.msra.mxu0 0.0
        %554 = vmatprep.subr.mxu0 0.0
        %555 = vmatpush1.msra.mxu0 0.0
        %556 = vmatprep.subr.mxu0 0.0
        %557 = vmatpush1.msra.mxu0 0.0
        %558 = vmatprep.subr.mxu0 0.0
        %559 = vmatpush1.msra.mxu0 0.0
        %560 = vmatprep.subr.mxu0 0.0
        %561 = vmatpush1.msra.mxu0 0.0
        %562 = vmatprep.subr.mxu0 0.0
        %563 = vmatpush1.msra.mxu0 0.0
        %564 = vmatprep.subr.mxu0 0.0
        %565 = vmatpush1.msra.mxu0 0.0
        %566 = vmatprep.subr.mxu0 0.0
        %567 = vmatpush1.msra.mxu0 0.0
        %568 = vmatprep.subr.mxu0 0.0
        %569 = vmatpush1.msra.mxu0 0.0
        %570 = vmatprep.subr.mxu0 0.0
        %571 = vmatpush1.msra.mxu0 0.0
        %572 = vmatprep.subr.mxu0 0.0
        %573 = vmatpush1.msra.mxu0 0.0
        %574 = vmatprep.subr.mxu0 0.0
        %575 = vmatpush1.msra.mxu0 0.0
        %576 = vmatprep.subr.mxu0 0.0
        %577 = vmatpush1.msra.mxu0 0.0
        %578 = vmatprep.subr.mxu0 0.0
        %579 = vmatpush1.msra.mxu0 0.0
        %580 = vmatprep.subr.mxu0 0.0
        %581 = vmatpush1.msra.mxu0 0.0
        %582 = vmatprep.mubr.f32.mxu0 0.0
        %583 = vmatmul.mubr.f32.gmra.mrb[0].mxu0 %v516
        %v584 = vpop.f32.mrb[0].mxu0
        %v585 = vadd.f32 %v512, %v584
        %v586 = vpop.f32.mrb[0].mxu0
        %587 = vdwg.mxu0
        %v588 = vadd.f32 %v429, %v585
        %v590 = vsel %vm327, %v588, 0
        %v593 = vsel %vm327, %v313, 0
        %v596 = vsel %vm327, %v314, 0
        %v599 = vsel %vm327, %v315, 0
        %v602 = vsel %vm327, %v316, 0
        %v605 = vsel %vm327, %v317, 0
        %v608 = vsel %vm327, %v318, 0
        %v611 = vsel %vm327, %v319, 0
        %v614 = vsel %vm327, %v320, 0
        %616 = vmatprep.subr.mxu0 0.0
        %617 = vmatpush1.xpose.msra.mxu0 %v593
        %618 = vmatprep.subr.mxu0 0.0
        %619 = vmatpush1.xpose.msra.mxu0 %v596
        %620 = vmatprep.subr.mxu0 0.0
        %621 = vmatpush1.xpose.msra.mxu0 %v599
        %622 = vmatprep.subr.mxu0 0.0
        %623 = vmatpush1.xpose.msra.mxu0 %v602
        %624 = vmatprep.subr.mxu0 0.0
        %625 = vmatpush1.xpose.msra.mxu0 %v605
        %626 = vmatprep.subr.mxu0 0.0
        %627 = vmatpush1.xpose.msra.mxu0 %v608
        %628 = vmatprep.subr.mxu0 0.0
        %629 = vmatpush1.xpose.msra.mxu0 %v611
        %630 = vmatprep.subr.mxu0 0.0
        %631 = vmatpush1.xpose.msra.mxu0 %v614
        %632 = vmatprep.subr.mxu0 0.0
        %633 = vmatpush1.xpose.msra.mxu0 0.0
        %634 = vmatprep.subr.mxu0 0.0
        %635 = vmatpush1.xpose.msra.mxu0 0.0
        %636 = vmatprep.subr.mxu0 0.0
        %637 = vmatpush1.xpose.msra.mxu0 0.0
        %638 = vmatprep.subr.mxu0 0.0
        %639 = vmatpush1.xpose.msra.mxu0 0.0
        %640 = vmatprep.subr.mxu0 0.0
        %641 = vmatpush1.xpose.msra.mxu0 0.0
        %642 = vmatprep.subr.mxu0 0.0
        %643 = vmatpush1.xpose.msra.mxu0 0.0
        %644 = vmatprep.subr.mxu0 0.0
        %645 = vmatpush1.xpose.msra.mxu0 0.0
        %646 = vmatprep.subr.mxu0 0.0
        %647 = vmatpush1.xpose.msra.mxu0 0.0
        %648 = vmatprep.subr.mxu0 0.0
        %649 = vmatpush1.xpose.msra.mxu0 0.0
        %650 = vmatprep.subr.mxu0 0.0
        %651 = vmatpush1.xpose.msra.mxu0 0.0
        %652 = vmatprep.subr.mxu0 0.0
        %653 = vmatpush1.xpose.msra.mxu0 0.0
        %654 = vmatprep.subr.mxu0 0.0
        %655 = vmatpush1.xpose.msra.mxu0 0.0
        %656 = vmatprep.subr.mxu0 0.0
        %657 = vmatpush1.xpose.msra.mxu0 0.0
        %658 = vmatprep.subr.mxu0 0.0
        %659 = vmatpush1.xpose.msra.mxu0 0.0
        %660 = vmatprep.subr.mxu0 0.0
        %661 = vmatpush1.xpose.msra.mxu0 0.0
        %662 = vmatprep.subr.mxu0 0.0
        %663 = vmatpush1.xpose.msra.mxu0 0.0
        %664 = vmatprep.subr.mxu0 0.0
        %665 = vmatpush1.xpose.msra.mxu0 0.0
        %666 = vmatprep.subr.mxu0 0.0
        %667 = vmatpush1.xpose.msra.mxu0 0.0
        %668 = vmatprep.subr.mxu0 0.0
        %669 = vmatpush1.xpose.msra.mxu0 0.0
        %670 = vmatprep.subr.mxu0 0.0
        %671 = vmatpush1.xpose.msra.mxu0 0.0
        %672 = vmatprep.subr.mxu0 0.0
        %673 = vmatpush1.xpose.msra.mxu0 0.0
        %674 = vmatprep.subr.mxu0 0.0
        %675 = vmatpush1.xpose.msra.mxu0 0.0
        %676 = vmatprep.subr.mxu0 0.0
        %677 = vmatpush1.xpose.msra.mxu0 0.0
        %678 = vmatprep.subr.mxu0 0.0
        %679 = vmatpush1.xpose.msra.mxu0 0.0
        %680 = vmatprep.mubr.f32.mxu0 0.0
        %681 = vmatmul.mubr.f32.gmra.mrb[0].mxu0 %v590
        %v682 = vpop.f32.mrb[0].mxu0
        %v683 = vadd.f32 0.0, %v682
        %v684 = vpop.f32.mrb[0].mxu0
        %685 = vdwg.mxu0
        %v686 = vlaneseq
        %v687 = vand.u32 %v686, 127
        %vm688 = vcmask 523264
        %v689 = vsel %vm688, %v683, -inf
        %690 = vmax.xlane.f32.xlu0 %v689
        %v691 = vpop.xlane.xlu0 %690
        %vm692 = vcmp.eq.f32.partialorder %v683, %v691
        %v693 = vsel %vm692, %v687, 64
        %v694 = vsel %vm688, %v693, 2147483647
        %v695 = vand.u32 %v694, 65535
        %v696 = vshra.s32 %v694, 16
        %v697 = vcvt.s32.f32 %v695
        %v698 = vcvt.s32.f32 %v696
        %699 = vmin.xlane.f32.xlu0 %v698
        %v700 = vpop.xlane.xlu0 %699
        %vm701 = vcmp.eq.f32.partialorder %v698, %v700
        %v702 = vsel %vm701, %v697, inf
        %703 = vmin.xlane.f32.xlu0 %v702
        %v704 = vpop.xlane.xlu0 %703
        %v705 = vcvt.f32.s32 %v704
        %v706 = vcvt.f32.s32 %v700
        %v707 = vshll.u32 %v706, 16
        %v708 = vadd.s32 %v707, %v705
        %vm709 = vcmp.eq.s32.totalorder %v687, %v708
        %v710 = vsel %vm709, 1.0, 0.0
        %v711 = vsel %vm709, -1e+30, %v683
        %vm712 = vcmp.eq.s32.totalorder %v687, 0
        %v713 = vsel %vm712, %v691, 0.0
        %v714 = vsel %vm688, %v711, -inf
        %715 = vmax.xlane.f32.xlu0 %v714
        %v716 = vpop.xlane.xlu0 %715
        %vm717 = vcmp.eq.f32.partialorder %v711, %v716
        %v718 = vsel %vm717, %v687, 64
        %v719 = vsel %vm688, %v718, 2147483647
        %v720 = vand.u32 %v719, 65535
        %v721 = vshra.s32 %v719, 16
        %v722 = vcvt.s32.f32 %v720
        %v723 = vcvt.s32.f32 %v721
        %724 = vmin.xlane.f32.xlu0 %v723
        %v725 = vpop.xlane.xlu0 %724
        %vm726 = vcmp.eq.f32.partialorder %v723, %v725
        %v727 = vsel %vm726, %v722, inf
        %728 = vmin.xlane.f32.xlu0 %v727
        %v729 = vpop.xlane.xlu0 %728
        %v730 = vcvt.f32.s32 %v729
        %v731 = vcvt.f32.s32 %v725
        %v732 = vshll.u32 %v731, 16
        %v733 = vadd.s32 %v732, %v730
        %vm734 = vcmp.eq.s32.totalorder %v687, %v733
        %v735 = vsel %vm734, 1.0, %v710
        %v736 = vsel %vm734, -1e+30, %v711
        %vm737 = vcmp.eq.s32.totalorder %v687, 1
        %v738 = vsel %vm737, %v716, %v713
        %v739 = vsel %vm688, %v736, -inf
        %740 = vmax.xlane.f32.xlu0 %v739
        %v741 = vpop.xlane.xlu0 %740
        %vm742 = vcmp.eq.f32.partialorder %v736, %v741
        %v743 = vsel %vm742, %v687, 64
        %v744 = vsel %vm688, %v743, 2147483647
        %v745 = vand.u32 %v744, 65535
        %v746 = vshra.s32 %v744, 16
        %v747 = vcvt.s32.f32 %v745
        %v748 = vcvt.s32.f32 %v746
        %749 = vmin.xlane.f32.xlu0 %v748
        %v750 = vpop.xlane.xlu0 %749
        %vm751 = vcmp.eq.f32.partialorder %v748, %v750
        %v752 = vsel %vm751, %v747, inf
        %753 = vmin.xlane.f32.xlu0 %v752
        %v754 = vpop.xlane.xlu0 %753
        %v755 = vcvt.f32.s32 %v754
        %v756 = vcvt.f32.s32 %v750
        %v757 = vshll.u32 %v756, 16
        %v758 = vadd.s32 %v757, %v755
        %vm759 = vcmp.eq.s32.totalorder %v687, %v758
        %v760 = vsel %vm759, 1.0, %v735
        %v761 = vsel %vm759, -1e+30, %v736
        %vm762 = vcmp.eq.s32.totalorder %v687, 2
        %v763 = vsel %vm762, %v741, %v738
        %v764 = vsel %vm688, %v761, -inf
        %765 = vmax.xlane.f32.xlu0 %v764
        %v766 = vpop.xlane.xlu0 %765
        %vm767 = vcmp.eq.f32.partialorder %v761, %v766
        %v768 = vsel %vm767, %v687, 64
        %v769 = vsel %vm688, %v768, 2147483647
        %v770 = vand.u32 %v769, 65535
        %v771 = vshra.s32 %v769, 16
        %v772 = vcvt.s32.f32 %v770
        %v773 = vcvt.s32.f32 %v771
        %774 = vmin.xlane.f32.xlu0 %v773
        %v775 = vpop.xlane.xlu0 %774
        %vm776 = vcmp.eq.f32.partialorder %v773, %v775
        %v777 = vsel %vm776, %v772, inf
        %778 = vmin.xlane.f32.xlu0 %v777
        %v779 = vpop.xlane.xlu0 %778
        %v780 = vcvt.f32.s32 %v779
        %v781 = vcvt.f32.s32 %v775
        %v782 = vshll.u32 %v781, 16
        %v783 = vadd.s32 %v782, %v780
        %vm784 = vcmp.eq.s32.totalorder %v687, %v783
        %v785 = vsel %vm784, 1.0, %v760
        %v786 = vsel %vm784, -1e+30, %v761
        %vm787 = vcmp.eq.s32.totalorder %v687, 3
        %v788 = vsel %vm787, %v766, %v763
        %v789 = vsel %vm688, %v786, -inf
        %790 = vmax.xlane.f32.xlu0 %v789
        %v791 = vpop.xlane.xlu0 %790
        %vm792 = vcmp.eq.f32.partialorder %v786, %v791
        %v793 = vsel %vm792, %v687, 64
        %v794 = vsel %vm688, %v793, 2147483647
        %v795 = vand.u32 %v794, 65535
        %v796 = vshra.s32 %v794, 16
        %v797 = vcvt.s32.f32 %v795
        %v798 = vcvt.s32.f32 %v796
        %799 = vmin.xlane.f32.xlu0 %v798
        %v800 = vpop.xlane.xlu0 %799
        %vm801 = vcmp.eq.f32.partialorder %v798, %v800
        %v802 = vsel %vm801, %v797, inf
        %803 = vmin.xlane.f32.xlu0 %v802
        %v804 = vpop.xlane.xlu0 %803
        %v805 = vcvt.f32.s32 %v804
        %v806 = vcvt.f32.s32 %v800
        %v807 = vshll.u32 %v806, 16
        %v808 = vadd.s32 %v807, %v805
        %vm809 = vcmp.eq.s32.totalorder %v687, %v808
        %v810 = vsel %vm809, 1.0, %v785
        %v811 = vsel %vm809, -1e+30, %v786
        %vm812 = vcmp.eq.s32.totalorder %v687, 4
        %v813 = vsel %vm812, %v791, %v788
        %v814 = vsel %vm688, %v811, -inf
        %815 = vmax.xlane.f32.xlu0 %v814
        %v816 = vpop.xlane.xlu0 %815
        %vm817 = vcmp.eq.f32.partialorder %v811, %v816
        %v818 = vsel %vm817, %v687, 64
        %v819 = vsel %vm688, %v818, 2147483647
        %v820 = vand.u32 %v819, 65535
        %v821 = vshra.s32 %v819, 16
        %v822 = vcvt.s32.f32 %v820
        %v823 = vcvt.s32.f32 %v821
        %824 = vmin.xlane.f32.xlu0 %v823
        %v825 = vpop.xlane.xlu0 %824
        %vm826 = vcmp.eq.f32.partialorder %v823, %v825
        %v827 = vsel %vm826, %v822, inf
        %828 = vmin.xlane.f32.xlu0 %v827
        %v829 = vpop.xlane.xlu0 %828
        %v830 = vcvt.f32.s32 %v829
        %v831 = vcvt.f32.s32 %v825
        %v832 = vshll.u32 %v831, 16
        %v833 = vadd.s32 %v832, %v830
        %vm834 = vcmp.eq.s32.totalorder %v687, %v833
        %v835 = vsel %vm834, 1.0, %v810
        %v836 = vsel %vm834, -1e+30, %v811
        %vm837 = vcmp.eq.s32.totalorder %v687, 5
        %v838 = vsel %vm837, %v816, %v813
        %v839 = vsel %vm688, %v836, -inf
        %840 = vmax.xlane.f32.xlu0 %v839
        %v841 = vpop.xlane.xlu0 %840
        %vm842 = vcmp.eq.f32.partialorder %v836, %v841
        %v843 = vsel %vm842, %v687, 64
        %v844 = vsel %vm688, %v843, 2147483647
        %v845 = vand.u32 %v844, 65535
        %v846 = vshra.s32 %v844, 16
        %v847 = vcvt.s32.f32 %v845
        %v848 = vcvt.s32.f32 %v846
        %849 = vmin.xlane.f32.xlu0 %v848
        %v850 = vpop.xlane.xlu0 %849
        %vm851 = vcmp.eq.f32.partialorder %v848, %v850
        %v852 = vsel %vm851, %v847, inf
        %853 = vmin.xlane.f32.xlu0 %v852
        %v854 = vpop.xlane.xlu0 %853
        %v855 = vcvt.f32.s32 %v854
        %v856 = vcvt.f32.s32 %v850
        %v857 = vshll.u32 %v856, 16
        %v858 = vadd.s32 %v857, %v855
        %vm859 = vcmp.eq.s32.totalorder %v687, %v858
        %v860 = vsel %vm859, 1.0, %v835
        %v861 = vsel %vm859, -1e+30, %v836
        %vm862 = vcmp.eq.s32.totalorder %v687, 6
        %v863 = vsel %vm862, %v841, %v838
        %v864 = vsel %vm688, %v861, -inf
        %865 = vmax.xlane.f32.xlu0 %v864
        %v866 = vpop.xlane.xlu0 %865
        %vm867 = vcmp.eq.f32.partialorder %v861, %v866
        %v868 = vsel %vm867, %v687, 64
        %v869 = vsel %vm688, %v868, 2147483647
        %v870 = vand.u32 %v869, 65535
        %v871 = vshra.s32 %v869, 16
        %v872 = vcvt.s32.f32 %v870
        %v873 = vcvt.s32.f32 %v871
        %874 = vmin.xlane.f32.xlu0 %v873
        %v875 = vpop.xlane.xlu0 %874
        %vm876 = vcmp.eq.f32.partialorder %v873, %v875
        %v877 = vsel %vm876, %v872, inf
        %878 = vmin.xlane.f32.xlu0 %v877
        %v879 = vpop.xlane.xlu0 %878
        %v880 = vcvt.f32.s32 %v879
        %v881 = vcvt.f32.s32 %v875
        %v882 = vshll.u32 %v881, 16
        %v883 = vadd.s32 %v882, %v880
        %vm884 = vcmp.eq.s32.totalorder %v687, %v883
        %v885 = vsel %vm884, 1.0, %v860
        %v886 = vsel %vm884, -1e+30, %v861
        %vm887 = vcmp.eq.s32.totalorder %v687, 7
        %v888 = vsel %vm887, %v866, %v863
        %v889 = vsel %vm688, %v886, -inf
        %890 = vmax.xlane.f32.xlu0 %v889
        %v891 = vpop.xlane.xlu0 %890
        %vm892 = vcmp.eq.f32.partialorder %v886, %v891
        %v893 = vsel %vm892, %v687, 64
        %v894 = vsel %vm688, %v893, 2147483647
        %v895 = vand.u32 %v894, 65535
        %v896 = vshra.s32 %v894, 16
        %v897 = vcvt.s32.f32 %v895
        %v898 = vcvt.s32.f32 %v896
        %899 = vmin.xlane.f32.xlu0 %v898
        %v900 = vpop.xlane.xlu0 %899
        %vm901 = vcmp.eq.f32.partialorder %v898, %v900
        %v902 = vsel %vm901, %v897, inf
        %903 = vmin.xlane.f32.xlu0 %v902
        %v904 = vpop.xlane.xlu0 %903
        %v905 = vcvt.f32.s32 %v904
        %v906 = vcvt.f32.s32 %v900
        %v907 = vshll.u32 %v906, 16
        %v908 = vadd.s32 %v907, %v905
        %vm909 = vcmp.eq.s32.totalorder %v687, %v908
        %v910 = vsel %vm909, 1.0, %v885
        %v911 = vsel %vm909, -1e+30, %v886
        %vm912 = vcmp.eq.s32.totalorder %v687, 8
        %v913 = vsel %vm912, %v891, %v888
        %v914 = vsel %vm688, %v911, -inf
        %915 = vmax.xlane.f32.xlu0 %v914
        %v916 = vpop.xlane.xlu0 %915
        %vm917 = vcmp.eq.f32.partialorder %v911, %v916
        %v918 = vsel %vm917, %v687, 64
        %v919 = vsel %vm688, %v918, 2147483647
        %v920 = vand.u32 %v919, 65535
        %v921 = vshra.s32 %v919, 16
        %v922 = vcvt.s32.f32 %v920
        %v923 = vcvt.s32.f32 %v921
        %924 = vmin.xlane.f32.xlu0 %v923
        %v925 = vpop.xlane.xlu0 %924
        %vm926 = vcmp.eq.f32.partialorder %v923, %v925
        %v927 = vsel %vm926, %v922, inf
        %928 = vmin.xlane.f32.xlu0 %v927
        %v929 = vpop.xlane.xlu0 %928
        %v930 = vcvt.f32.s32 %v929
        %v931 = vcvt.f32.s32 %v925
        %v932 = vshll.u32 %v931, 16
        %v933 = vadd.s32 %v932, %v930
        %vm934 = vcmp.eq.s32.totalorder %v687, %v933
        %v935 = vsel %vm934, 1.0, %v910
        %v936 = vsel %vm934, -1e+30, %v911
        %vm937 = vcmp.eq.s32.totalorder %v687, 9
        %v938 = vsel %vm937, %v916, %v913
        %v939 = vsel %vm688, %v936, -inf
        %940 = vmax.xlane.f32.xlu0 %v939
        %v941 = vpop.xlane.xlu0 %940
        %vm942 = vcmp.eq.f32.partialorder %v936, %v941
        %v943 = vsel %vm942, %v687, 64
        %v944 = vsel %vm688, %v943, 2147483647
        %v945 = vand.u32 %v944, 65535
        %v946 = vshra.s32 %v944, 16
        %v947 = vcvt.s32.f32 %v945
        %v948 = vcvt.s32.f32 %v946
        %949 = vmin.xlane.f32.xlu0 %v948
        %v950 = vpop.xlane.xlu0 %949
        %vm951 = vcmp.eq.f32.partialorder %v948, %v950
        %v952 = vsel %vm951, %v947, inf
        %953 = vmin.xlane.f32.xlu0 %v952
        %v954 = vpop.xlane.xlu0 %953
        %v955 = vcvt.f32.s32 %v954
        %v956 = vcvt.f32.s32 %v950
        %v957 = vshll.u32 %v956, 16
        %v958 = vadd.s32 %v957, %v955
        %vm959 = vcmp.eq.s32.totalorder %v687, %v958
        %v960 = vsel %vm959, 1.0, %v935
        %v961 = vsel %vm959, -1e+30, %v936
        %vm962 = vcmp.eq.s32.totalorder %v687, 10
        %v963 = vsel %vm962, %v941, %v938
        %v964 = vsel %vm688, %v961, -inf
        %965 = vmax.xlane.f32.xlu0 %v964
        %v966 = vpop.xlane.xlu0 %965
        %vm967 = vcmp.eq.f32.partialorder %v961, %v966
        %v968 = vsel %vm967, %v687, 64
        %v969 = vsel %vm688, %v968, 2147483647
        %v970 = vand.u32 %v969, 65535
        %v971 = vshra.s32 %v969, 16
        %v972 = vcvt.s32.f32 %v970
        %v973 = vcvt.s32.f32 %v971
        %974 = vmin.xlane.f32.xlu0 %v973
        %v975 = vpop.xlane.xlu0 %974
        %vm976 = vcmp.eq.f32.partialorder %v973, %v975
        %v977 = vsel %vm976, %v972, inf
        %978 = vmin.xlane.f32.xlu0 %v977
        %v979 = vpop.xlane.xlu0 %978
        %v980 = vcvt.f32.s32 %v979
        %v981 = vcvt.f32.s32 %v975
        %v982 = vshll.u32 %v981, 16
        %v983 = vadd.s32 %v982, %v980
        %vm984 = vcmp.eq.s32.totalorder %v687, %v983
        %v985 = vsel %vm984, 1.0, %v960
        %v986 = vsel %vm984, -1e+30, %v961
        %vm987 = vcmp.eq.s32.totalorder %v687, 11
        %v988 = vsel %vm987, %v966, %v963
        %v989 = vsel %vm688, %v986, -inf
        %990 = vmax.xlane.f32.xlu0 %v989
        %v991 = vpop.xlane.xlu0 %990
        %vm992 = vcmp.eq.f32.partialorder %v986, %v991
        %v993 = vsel %vm992, %v687, 64
        %v994 = vsel %vm688, %v993, 2147483647
        %v995 = vand.u32 %v994, 65535
        %v996 = vshra.s32 %v994, 16
        %v997 = vcvt.s32.f32 %v995
        %v998 = vcvt.s32.f32 %v996
        %999 = vmin.xlane.f32.xlu0 %v998
        %v1000 = vpop.xlane.xlu0 %999
        %vm1001 = vcmp.eq.f32.partialorder %v998, %v1000
        %v1002 = vsel %vm1001, %v997, inf
        %1003 = vmin.xlane.f32.xlu0 %v1002
        %v1004 = vpop.xlane.xlu0 %1003
        %v1005 = vcvt.f32.s32 %v1004
        %v1006 = vcvt.f32.s32 %v1000
        %v1007 = vshll.u32 %v1006, 16
        %v1008 = vadd.s32 %v1007, %v1005
        %vm1009 = vcmp.eq.s32.totalorder %v687, %v1008
        %v1010 = vsel %vm1009, 1.0, %v985
        %v1011 = vsel %vm1009, -1e+30, %v986
        %vm1012 = vcmp.eq.s32.totalorder %v687, 12
        %v1013 = vsel %vm1012, %v991, %v988
        %v1014 = vsel %vm688, %v1011, -inf
        %1015 = vmax.xlane.f32.xlu0 %v1014
        %v1016 = vpop.xlane.xlu0 %1015
        %vm1017 = vcmp.eq.f32.partialorder %v1011, %v1016
        %v1018 = vsel %vm1017, %v687, 64
        %v1019 = vsel %vm688, %v1018, 2147483647
        %v1020 = vand.u32 %v1019, 65535
        %v1021 = vshra.s32 %v1019, 16
        %v1022 = vcvt.s32.f32 %v1020
        %v1023 = vcvt.s32.f32 %v1021
        %1024 = vmin.xlane.f32.xlu0 %v1023
        %v1025 = vpop.xlane.xlu0 %1024
        %vm1026 = vcmp.eq.f32.partialorder %v1023, %v1025
        %v1027 = vsel %vm1026, %v1022, inf
        %1028 = vmin.xlane.f32.xlu0 %v1027
        %v1029 = vpop.xlane.xlu0 %1028
        %v1030 = vcvt.f32.s32 %v1029
        %v1031 = vcvt.f32.s32 %v1025
        %v1032 = vshll.u32 %v1031, 16
        %v1033 = vadd.s32 %v1032, %v1030
        %vm1034 = vcmp.eq.s32.totalorder %v687, %v1033
        %v1035 = vsel %vm1034, 1.0, %v1010
        %v1036 = vsel %vm1034, -1e+30, %v1011
        %vm1037 = vcmp.eq.s32.totalorder %v687, 13
        %v1038 = vsel %vm1037, %v1016, %v1013
        %v1039 = vsel %vm688, %v1036, -inf
        %1040 = vmax.xlane.f32.xlu0 %v1039
        %v1041 = vpop.xlane.xlu0 %1040
        %vm1042 = vcmp.eq.f32.partialorder %v1036, %v1041
        %v1043 = vsel %vm1042, %v687, 64
        %v1044 = vsel %vm688, %v1043, 2147483647
        %v1045 = vand.u32 %v1044, 65535
        %v1046 = vshra.s32 %v1044, 16
        %v1047 = vcvt.s32.f32 %v1045
        %v1048 = vcvt.s32.f32 %v1046
        %1049 = vmin.xlane.f32.xlu0 %v1048
        %v1050 = vpop.xlane.xlu0 %1049
        %vm1051 = vcmp.eq.f32.partialorder %v1048, %v1050
        %v1052 = vsel %vm1051, %v1047, inf
        %1053 = vmin.xlane.f32.xlu0 %v1052
        %v1054 = vpop.xlane.xlu0 %1053
        %v1055 = vcvt.f32.s32 %v1054
        %v1056 = vcvt.f32.s32 %v1050
        %v1057 = vshll.u32 %v1056, 16
        %v1058 = vadd.s32 %v1057, %v1055
        %vm1059 = vcmp.eq.s32.totalorder %v687, %v1058
        %v1060 = vsel %vm1059, 1.0, %v1035
        %v1061 = vsel %vm1059, -1e+30, %v1036
        %vm1062 = vcmp.eq.s32.totalorder %v687, 14
        %v1063 = vsel %vm1062, %v1041, %v1038
        %v1064 = vsel %vm688, %v1061, -inf
        %1065 = vmax.xlane.f32.xlu0 %v1064
        %v1066 = vpop.xlane.xlu0 %1065
        %vm1067 = vcmp.eq.f32.partialorder %v1061, %v1066
        %v1068 = vsel %vm1067, %v687, 64
        %v1069 = vsel %vm688, %v1068, 2147483647
        %v1070 = vand.u32 %v1069, 65535
        %v1071 = vshra.s32 %v1069, 16
        %v1072 = vcvt.s32.f32 %v1070
        %v1073 = vcvt.s32.f32 %v1071
        %1074 = vmin.xlane.f32.xlu0 %v1073
        %v1075 = vpop.xlane.xlu0 %1074
        %vm1076 = vcmp.eq.f32.partialorder %v1073, %v1075
        %v1077 = vsel %vm1076, %v1072, inf
        %1078 = vmin.xlane.f32.xlu0 %v1077
        %v1079 = vpop.xlane.xlu0 %1078
        %v1080 = vcvt.f32.s32 %v1079
        %v1081 = vcvt.f32.s32 %v1075
        %v1082 = vshll.u32 %v1081, 16
        %v1083 = vadd.s32 %v1082, %v1080
        %vm1084 = vcmp.eq.s32.totalorder %v687, %v1083
        %v1085 = vsel %vm1084, 1.0, %v1060
        %vm1086 = vcmp.eq.s32.totalorder %v687, 15
        %v1087 = vsel %vm1086, %v1066, %v1063
        %vm1088 = vcmask 130048
        %1089 = vst.msk [vmem:[%s311] sm:$0xff] %vm1088, %v1087
        %vm1090 = vcmp.gt.f32.partialorder %v1085, 0.0
        %v1091 = vsel %vm1090, %v683, -1e+30
        %v1092 = vsel %vm688, %v1091, -inf
        %1093 = vmax.xlane.f32.xlu0 %v1092
        %v1094 = vpop.xlane.xlu0 %1093
        %v1095 = vsub.f32 %v1091, %v1094
        %v1096 = vmul.f32 %v1095, 1.442695
        %v1097 = vpow.pop %v1096
        %v1098 = vsel %vm688, %v1097, 0.0
        %1099 = vadd.xlane.f32.xlu0 %v1098
        %v1100 = vpop.xlane.xlu0 %1099
        %v1101 = vrcp.pop %v1100
        %v1102 = vmul.f32 %v1100, %v1101
        %v1103 = vsub.f32 2.0, %v1102
        %v1104 = vmul.f32 %v1101, %v1103
        %v1105 = vmul.f32 %v1097, %v1104
        %v1107 = vsel %vm688, %v1105, 0
        %1109 = vmatprep.subr.mxu0 0.0
        %1110 = vmatpush1.msra.mxu0 %v313
        %1111 = vmatprep.subr.mxu0 0.0
        %1112 = vmatpush1.msra.mxu0 %v314
        %1113 = vmatprep.subr.mxu0 0.0
        %1114 = vmatpush1.msra.mxu0 %v315
        %1115 = vmatprep.subr.mxu0 0.0
        %1116 = vmatpush1.msra.mxu0 %v316
        %1117 = vmatprep.subr.mxu0 0.0
        %1118 = vmatpush1.msra.mxu0 %v317
        %1119 = vmatprep.subr.mxu0 0.0
        %1120 = vmatpush1.msra.mxu0 %v318
        %1121 = vmatprep.subr.mxu0 0.0
        %1122 = vmatpush1.msra.mxu0 %v319
        %1123 = vmatprep.subr.mxu0 0.0
        %1124 = vmatpush1.msra.mxu0 %v320
        %1125 = vmatprep.subr.mxu0 0.0
        %1126 = vmatpush1.msra.mxu0 0.0
        %1127 = vmatprep.subr.mxu0 0.0
        %1128 = vmatpush1.msra.mxu0 0.0
        %1129 = vmatprep.subr.mxu0 0.0
        %1130 = vmatpush1.msra.mxu0 0.0
        %1131 = vmatprep.subr.mxu0 0.0
        %1132 = vmatpush1.msra.mxu0 0.0
        %1133 = vmatprep.subr.mxu0 0.0
        %1134 = vmatpush1.msra.mxu0 0.0
        %1135 = vmatprep.subr.mxu0 0.0
        %1136 = vmatpush1.msra.mxu0 0.0
        %1137 = vmatprep.subr.mxu0 0.0
        %1138 = vmatpush1.msra.mxu0 0.0
        %1139 = vmatprep.subr.mxu0 0.0
        %1140 = vmatpush1.msra.mxu0 0.0
        %1141 = vmatprep.subr.mxu0 0.0
        %1142 = vmatpush1.msra.mxu0 0.0
        %1143 = vmatprep.subr.mxu0 0.0
        %1144 = vmatpush1.msra.mxu0 0.0
        %1145 = vmatprep.subr.mxu0 0.0
        %1146 = vmatpush1.msra.mxu0 0.0
        %1147 = vmatprep.subr.mxu0 0.0
        %1148 = vmatpush1.msra.mxu0 0.0
        %1149 = vmatprep.subr.mxu0 0.0
        %1150 = vmatpush1.msra.mxu0 0.0
        %1151 = vmatprep.subr.mxu0 0.0
        %1152 = vmatpush1.msra.mxu0 0.0
        %1153 = vmatprep.subr.mxu0 0.0
        %1154 = vmatpush1.msra.mxu0 0.0
        %1155 = vmatprep.subr.mxu0 0.0
        %1156 = vmatpush1.msra.mxu0 0.0
        %1157 = vmatprep.subr.mxu0 0.0
        %1158 = vmatpush1.msra.mxu0 0.0
        %1159 = vmatprep.subr.mxu0 0.0
        %1160 = vmatpush1.msra.mxu0 0.0
        %1161 = vmatprep.subr.mxu0 0.0
        %1162 = vmatpush1.msra.mxu0 0.0
        %1163 = vmatprep.subr.mxu0 0.0
        %1164 = vmatpush1.msra.mxu0 0.0
        %1165 = vmatprep.subr.mxu0 0.0
        %1166 = vmatpush1.msra.mxu0 0.0
        %1167 = vmatprep.subr.mxu0 0.0
        %1168 = vmatpush1.msra.mxu0 0.0
        %1169 = vmatprep.subr.mxu0 0.0
        %1170 = vmatpush1.msra.mxu0 0.0
        %1171 = vmatprep.subr.mxu0 0.0
        %1172 = vmatpush1.msra.mxu0 0.0
        %1173 = vmatprep.mubr.f32.mxu0 0.0
        %1174 = vmatmul.mubr.f32.gmra.mrb[0].mxu0 %v1107
        %v1175 = vpop.f32.mrb[0].mxu0
        %v1176 = vadd.f32 0.0, %v1175
        %v1177 = vpop.f32.mrb[0].mxu0
        %1178 = vdwg.mxu0
        %v1179 = vld [vmem:[%s4] sm:$0xff]
        %v1180 = vld [vmem:[%s4 + $0x8] sm:$0xff]
        %v1181 = vld [vmem:[%s4 + $0x10] sm:$0xff]
        %v1182 = vld [vmem:[%s4 + $0x18] sm:$0xff]
        %v1184 = vsel %vm327, %v1176, 0
        %1186 = vmatprep.subr.mxu0 0.0
        %1187 = vmatpush1.msra.mxu0 %v1179
        %1188 = vmatprep.subr.mxu0 0.0
        %1189 = vmatpush1.msra.mxu0 %v1180
        %1190 = vmatprep.subr.mxu0 0.0
        %1191 = vmatpush1.msra.mxu0 %v1181
        %1192 = vmatprep.subr.mxu0 0.0
        %1193 = vmatpush1.msra.mxu0 %v1182
        %1194 = vmatprep.subr.mxu0 0.0
        %1195 = vmatpush1.msra.mxu0 0.0
        %1196 = vmatprep.subr.mxu0 0.0
        %1197 = vmatpush1.msra.mxu0 0.0
        %1198 = vmatprep.subr.mxu0 0.0
        %1199 = vmatpush1.msra.mxu0 0.0
        %1200 = vmatprep.subr.mxu0 0.0
        %1201 = vmatpush1.msra.mxu0 0.0
        %1202 = vmatprep.subr.mxu0 0.0
        %1203 = vmatpush1.msra.mxu0 0.0
        %1204 = vmatprep.subr.mxu0 0.0
        %1205 = vmatpush1.msra.mxu0 0.0
        %1206 = vmatprep.subr.mxu0 0.0
        %1207 = vmatpush1.msra.mxu0 0.0
        %1208 = vmatprep.subr.mxu0 0.0
        %1209 = vmatpush1.msra.mxu0 0.0
        %1210 = vmatprep.subr.mxu0 0.0
        %1211 = vmatpush1.msra.mxu0 0.0
        %1212 = vmatprep.subr.mxu0 0.0
        %1213 = vmatpush1.msra.mxu0 0.0
        %1214 = vmatprep.subr.mxu0 0.0
        %1215 = vmatpush1.msra.mxu0 0.0
        %1216 = vmatprep.subr.mxu0 0.0
        %1217 = vmatpush1.msra.mxu0 0.0
        %1218 = vmatprep.subr.mxu0 0.0
        %1219 = vmatpush1.msra.mxu0 0.0
        %1220 = vmatprep.subr.mxu0 0.0
        %1221 = vmatpush1.msra.mxu0 0.0
        %1222 = vmatprep.subr.mxu0 0.0
        %1223 = vmatpush1.msra.mxu0 0.0
        %1224 = vmatprep.subr.mxu0 0.0
        %1225 = vmatpush1.msra.mxu0 0.0
        %1226 = vmatprep.subr.mxu0 0.0
        %1227 = vmatpush1.msra.mxu0 0.0
        %1228 = vmatprep.subr.mxu0 0.0
        %1229 = vmatpush1.msra.mxu0 0.0
        %1230 = vmatprep.subr.mxu0 0.0
        %1231 = vmatpush1.msra.mxu0 0.0
        %1232 = vmatprep.subr.mxu0 0.0
        %1233 = vmatpush1.msra.mxu0 0.0
        %1234 = vmatprep.subr.mxu0 0.0
        %1235 = vmatpush1.msra.mxu0 0.0
        %1236 = vmatprep.subr.mxu0 0.0
        %1237 = vmatpush1.msra.mxu0 0.0
        %1238 = vmatprep.subr.mxu0 0.0
        %1239 = vmatpush1.msra.mxu0 0.0
        %1240 = vmatprep.subr.mxu0 0.0
        %1241 = vmatpush1.msra.mxu0 0.0
        %1242 = vmatprep.subr.mxu0 0.0
        %1243 = vmatpush1.msra.mxu0 0.0
        %1244 = vmatprep.subr.mxu0 0.0
        %1245 = vmatpush1.msra.mxu0 0.0
        %1246 = vmatprep.subr.mxu0 0.0
        %1247 = vmatpush1.msra.mxu0 0.0
        %1248 = vmatprep.subr.mxu0 0.0
        %1249 = vmatpush1.msra.mxu0 0.0
        %1250 = vmatprep.mubr.f32.mxu0 0.0
        %1251 = vmatmul.mubr.f32.gmra.mrb[0].mxu0 %v1184
        %v1252 = vpop.f32.mrb[0].mxu0
        %v1253 = vadd.f32 0.0, %v1252
        %v1254 = vpop.f32.mrb[0].mxu0
        %1255 = vdwg.mxu0
        %v1256 = vlaneseq
        %v1257 = vshrl.u32 %v1256, 7
        %v1258 = vsub.s32 3, %v1257
        %v1259 = vrot.slane %v322, %v1258
        %1261 = vrot.lane.b32.xlu0 %v1259, 32
        %v1262 = vpop.permute.xlu0 %1261
        %v1264 = vadd.f32 %v1253, %v1262
        %1266 = vrot.lane.b32.xlu0 %v1253, 64
        %v1267 = vpop.permute.xlu0 %1266
        %v1269 = vadd.f32 %v398, %v1267
        %v1270 = vlaneseq
        %v1271 = vshrl.u32 %v1270, 7
        %v1272 = vsub.s32 7, %v1271
        %v1273 = vrot.slane %v321, %v1272
        %1275 = vrot.lane.b32.xlu0 %v1273, 64
        %v1276 = vpop.permute.xlu0 %1275
        %v1278 = vadd.f32 %v1269, %v1276
        %1280 = vrot.lane.b32.xlu0 %v1278, 64
        %v1281 = vpop.permute.xlu0 %1280
        %v1283 = vsel %vm327, %v1281, 0.0
        %1284 = vadd.xlane.f32.xlu0 %v1283
        %v1285 = vpop.xlane.xlu0 %1284
        %v1286 = vmul.f32 %v1285, %v409
        %v1287 = vsub.f32 %v1278, %v1286
        %v1288 = vmul.f32 %v1287, %v1287
        %1290 = vrot.lane.b32.xlu0 %v1288, 64
        %v1291 = vpop.permute.xlu0 %1290
        %v1293 = vsel %vm327, %v1291, 0.0
        %1294 = vadd.xlane.f32.xlu0 %v1293
        %v1295 = vpop.xlane.xlu0 %1294
        %v1296 = vmul.f32 %v1295, %v409
        %v1297 = vadd.f32 %v1296, 1e-05
        %v1298 = vrsqrt.pop %v1297
        %v1299 = vmul.f32 %v1287, %v1298
        %v1300 = vlaneseq
        %v1301 = vshrl.u32 %v1300, 7
        %v1302 = vsub.s32 0, %v1301
        %v1303 = vrot.slane %v322, %v1302
        %1305 = vrot.lane.b32.xlu0 %v1303, 64
        %v1306 = vpop.permute.xlu0 %1305
        %v1308 = vmul.f32 %v1299, %v1306
        %v1309 = vlaneseq
        %v1310 = vshrl.u32 %v1309, 7
        %v1311 = vsub.s32 1, %v1310
        %v1312 = vrot.slane %v322, %v1311
        %1314 = vrot.lane.b32.xlu0 %v1312, 64
        %v1315 = vpop.permute.xlu0 %1314
        %v1317 = vadd.f32 %v1308, %v1315
        %v1318 = vmul.f32 %v1317, 0.5
        %v1319 = vmul.f32 %v1317, 0.70710677
        %v1320 = vand.u32 2147483647, %v1319
        %v1321 = vmul.f32 %v1320, 0.3275911
        %v1322 = vadd.f32 %v1321, 1.0
        %v1323 = vrcp.pop %v1322
        %v1324 = vmul.f32 1.0, %v1323
        %v1325 = vmul.f32 %v1324, 1.0614054
        %v1326 = vadd.f32 %v1325, -1.4531521
        %v1327 = vmul.f32 %v1326, %v1324
        %v1328 = vadd.f32 %v1327, 1.4214138
        %v1329 = vmul.f32 %v1328, %v1324
        %v1330 = vadd.f32 %v1329, -0.28449672
        %v1331 = vmul.f32 %v1330, %v1324
        %v1332 = vadd.f32 %v1331, 0.2548296
        %v1333 = vmul.f32 %v1332, %v1324
        %v1334 = vsub.f32 0.0, %v1320
        %v1335 = vmul.f32 %v1334, %v1320
        %v1336 = vmul.f32 %v1335, 1.442695
        %v1337 = vpow.pop %v1336
        %v1338 = vmul.f32 %v1333, %v1337
        %v1339 = vsub.f32 1.0, %v1338
        %vm1340 = vcmp.ge.f32.partialorder %v1319, 0.0
        %v1341 = vsub.f32 0.0, %v1339
        %v1342 = vsel %vm1340, %v1339, %v1341
        %v1343 = vadd.f32 %v1342, 1.0
        %v1344 = vmul.f32 %v1318, %v1343
        %v1345 = vld [vmem:[%s5] sm:$0xff]
        %v1346 = vld [vmem:[%s5 + $0x8] sm:$0xff]
        %v1347 = vld [vmem:[%s5 + $0x10] sm:$0xff]
        %v1348 = vld [vmem:[%s5 + $0x18] sm:$0xff]
        %v1349 = vlaneseq
        %v1350 = vshrl.u32 %v1349, 7
        %v1351 = vsub.s32 2, %v1350
        %v1352 = vrot.slane %v322, %v1351
        %1354 = vrot.lane.b32.xlu0 %v1344, 64
        %v1355 = vpop.permute.xlu0 %1354
        %v1356 = vsel %vm327, %v1355, 0
        %1358 = vmatprep.subr.mxu0 0.0
        %1359 = vmatpush1.msra.mxu0 %v1345
        %1360 = vmatprep.subr.mxu0 0.0
        %1361 = vmatpush1.msra.mxu0 %v1346
        %1362 = vmatprep.subr.mxu0 0.0
        %1363 = vmatpush1.msra.mxu0 %v1347
        %1364 = vmatprep.subr.mxu0 0.0
        %1365 = vmatpush1.msra.mxu0 %v1348
        %1366 = vmatprep.subr.mxu0 0.0
        %1367 = vmatpush1.msra.mxu0 0.0
        %1368 = vmatprep.subr.mxu0 0.0
        %1369 = vmatpush1.msra.mxu0 0.0
        %1370 = vmatprep.subr.mxu0 0.0
        %1371 = vmatpush1.msra.mxu0 0.0
        %1372 = vmatprep.subr.mxu0 0.0
        %1373 = vmatpush1.msra.mxu0 0.0
        %1374 = vmatprep.subr.mxu0 0.0
        %1375 = vmatpush1.msra.mxu0 0.0
        %1376 = vmatprep.subr.mxu0 0.0
        %1377 = vmatpush1.msra.mxu0 0.0
        %1378 = vmatprep.subr.mxu0 0.0
        %1379 = vmatpush1.msra.mxu0 0.0
        %1380 = vmatprep.subr.mxu0 0.0
        %1381 = vmatpush1.msra.mxu0 0.0
        %1382 = vmatprep.subr.mxu0 0.0
        %1383 = vmatpush1.msra.mxu0 0.0
        %1384 = vmatprep.subr.mxu0 0.0
        %1385 = vmatpush1.msra.mxu0 0.0
        %1386 = vmatprep.subr.mxu0 0.0
        %1387 = vmatpush1.msra.mxu0 0.0
        %1388 = vmatprep.subr.mxu0 0.0
        %1389 = vmatpush1.msra.mxu0 0.0
        %1390 = vmatprep.subr.mxu0 0.0
        %1391 = vmatpush1.msra.mxu0 0.0
        %1392 = vmatprep.subr.mxu0 0.0
        %1393 = vmatpush1.msra.mxu0 0.0
        %1394 = vmatprep.subr.mxu0 0.0
        %1395 = vmatpush1.msra.mxu0 0.0
        %1396 = vmatprep.subr.mxu0 0.0
        %1397 = vmatpush1.msra.mxu0 0.0
        %1398 = vmatprep.subr.mxu0 0.0
        %1399 = vmatpush1.msra.mxu0 0.0
        %1400 = vmatprep.subr.mxu0 0.0
        %1401 = vmatpush1.msra.mxu0 0.0
        %1402 = vmatprep.subr.mxu0 0.0
        %1403 = vmatpush1.msra.mxu0 0.0
        %1404 = vmatprep.subr.mxu0 0.0
        %1405 = vmatpush1.msra.mxu0 0.0
        %1406 = vmatprep.subr.mxu0 0.0
        %1407 = vmatpush1.msra.mxu0 0.0
        %1408 = vmatprep.subr.mxu0 0.0
        %1409 = vmatpush1.msra.mxu0 0.0
        %1410 = vmatprep.subr.mxu0 0.0
        %1411 = vmatpush1.msra.mxu0 0.0
        %1412 = vmatprep.subr.mxu0 0.0
        %1413 = vmatpush1.msra.mxu0 0.0
        %1414 = vmatprep.subr.mxu0 0.0
        %1415 = vmatpush1.msra.mxu0 0.0
        %1416 = vmatprep.subr.mxu0 0.0
        %1417 = vmatpush1.msra.mxu0 0.0
        %1418 = vmatprep.subr.mxu0 0.0
        %1419 = vmatpush1.msra.mxu0 0.0
        %1420 = vmatprep.subr.mxu0 0.0
        %1421 = vmatpush1.msra.mxu0 0.0
        %1422 = vmatprep.mubr.f32.mxu0 0.0
        %1423 = vmatmul.mubr.f32.gmra.mrb[0].mxu0 %v1356
        %v1424 = vpop.f32.mrb[0].mxu0
        %v1425 = vadd.f32 %v1352, %v1424
        %v1426 = vpop.f32.mrb[0].mxu0
        %1427 = vdwg.mxu0
        %v1428 = vxor.u32 %v1425, 2147483648
        %v1429 = vmul.f32 %v1428, 1.442695
        %v1430 = vpow.pop %v1429
        %v1431 = vadd.f32 %v1430, 1.0
        %v1432 = vrcp.pop %v1431
        %v1433 = vmul.f32 1.0, %v1432
        %v1434 = vsub.f32 1.0, %v1433
        %v1435 = vmul.f32 %v312, %v1434
        %1437 = vrot.lane.b32.xlu0 %v1433, 32
        %v1438 = vpop.permute.xlu0 %1437
        %v1440 = vmul.f32 %v1264, %v1438
        %1442 = vrot.lane.b32.xlu0 %v1440, 96
        %v1443 = vpop.permute.xlu0 %1442
        %v1445 = vadd.f32 %v1435, %v1443
        %v1446 = vsel %vm327, %v1445, 0.0
        %1447 = vadd.xlane.f32.xlu0 %v1446
        %v1448 = vpop.xlane.xlu0 %1447
        %v1449 = vmul.f32 %v1448, %v409
        %v1450 = vsub.f32 %v1445, %v1449
        %v1451 = vmul.f32 %v1450, %v1450
        %v1452 = vsel %vm327, %v1451, 0.0
        %1453 = vadd.xlane.f32.xlu0 %v1452
        %v1454 = vpop.xlane.xlu0 %1453
        %v1455 = vmul.f32 %v1454, %v409
        %v1456 = vadd.f32 %v1455, 1e-05
        %v1457 = vrsqrt.pop %v1456
        %v1458 = vmul.f32 %v1450, %v1457
        %v1459 = vlaneseq
        %v1460 = vshrl.u32 %v1459, 7
        %v1461 = vsub.s32 4, %v1460
        %v1462 = vrot.slane %v322, %v1461
        %v1463 = vmul.f32 %v1458, %v1462
        %v1464 = vlaneseq
        %v1465 = vshrl.u32 %v1464, 7
        %v1466 = vsub.s32 5, %v1465
        %v1467 = vrot.slane %v322, %v1466
        %v1468 = vadd.f32 %v1463, %v1467
        %1469 = vst.msk [vmem:[%s297] sm:$0xff] %vm327, %v1468
        %s1470 = sand.u32 %s183, 1
        %s1471 = scalar_lea.sflag [#allocation3], %s1470
        %s1472 = sand.u32 %s183, 1
        %s1473 = smul.addr %s1472, 8
        %s1474 = scalar_lea.vmem [#allocation2], %s1473
        %p1475 = scmp.lt.s32.totalorder %s23, 1
        %s1476 = scalar_select %p1475, %s23, 1
        %s1477 = smul.addr %s1476, 8
        %s1478 = scalar_lea.vmem %s8, %s1477
        // Predicated region
        $region49: #{enhanced_rag_forward.1} parent=47 // pred_check
          %p1479 = pneg %p193
        $region50: #{enhanced_rag_forward.1} parent=47 // pred_check_branch
          %1481 = sbr.rel (%p1479) target = $region52
        $region51: #{enhanced_rag_forward.1} parent=47 // pred_region
          %s1483 = ssub.s32 128, 128
          %1484 = vsyncadd %s1471, %s1483
          %s1485 = smul.addr %s23, 128
          %s1486 = scalar_lea.hbm %s7, %s1485
          %s1488 = sshll.u32 %s1474, 4
          %s1489 = int_to_ptr.vmem [resolvable:$true] %s1488
          %1491 = dma.vmem_to_hbm [thread:$0]  %s1489, 128, %s1486, %s1471
        $region52: #{enhanced_rag_forward.1} parent=47 // pred_fallthru
          _
        // Predicated region
        $region53: #{enhanced_rag_forward.1} parent=47 // pred_check
          %p1492 = pneg %p219
        $region54: #{enhanced_rag_forward.1} parent=47 // pred_check_branch
          %1494 = sbr.rel (%p1492) target = $region56
        $region55: #{enhanced_rag_forward.1} parent=47 // pred_region
          _
        $region56: #{enhanced_rag_forward.1} parent=47 // pred_fallthru
          _
      $region48: #{enhanced_rag_forward.1} parent=5 // pred_fallthru
        _
      %p1495 = scmp.le.s32.totalorder 2, %s18
      // Predicated region
      $region57: #{enhanced_rag_forward.1} parent=5 // pred_check
        %p1496 = pneg %p1495
      $region58: #{enhanced_rag_forward.1} parent=5 // pred_check_branch
        %1498 = sbr.rel (%p1496) target = $region60
      $region59: #{enhanced_rag_forward.1} parent=5 // pred_region
        %s1499 = ssub.s32 %s18, 2
        // Predicated region
        $region61: #{enhanced_rag_forward.1} parent=59 // pred_check
          %p1500 = pneg %p199
        $region62: #{enhanced_rag_forward.1} parent=59 // pred_check_branch
          %1502 = sbr.rel (%p1500) target = $region64
        $region63: #{enhanced_rag_forward.1} parent=59 // pred_region
          %s1503 = sand.u32 %s184, 1
          %s1504 = scalar_lea.sflag [#allocation3], %s1503
          %s1505 = sand.u32 %s184, 1
          %s1506 = smul.addr %s1505, 8
          %s1507 = scalar_lea.vmem [#allocation2], %s1506
          %1508 = dma.done %s1504, 128
        $region64: #{enhanced_rag_forward.1} parent=59 // pred_fallthru
          _
        // Predicated region
        $region65: #{enhanced_rag_forward.1} parent=59 // pred_check
          %p1509 = pneg %p225
        $region66: #{enhanced_rag_forward.1} parent=59 // pred_check_branch
          %1511 = sbr.rel (%p1509) target = $region68
        $region67: #{enhanced_rag_forward.1} parent=59 // pred_region
          %p1512 = scmp.lt.s32.totalorder %s24, 1
          %s1513 = scalar_select %p1512, %s24, 1
          %s1514 = smul.addr %s1513, 8
          %s1515 = scalar_lea.vmem %s8, %s1514
        $region68: #{enhanced_rag_forward.1} parent=59 // pred_fallthru
          _
      $region60: #{enhanced_rag_forward.1} parent=5 // pred_fallthru
        _
    $region6: #{enhanced_rag_forward.1} parent=1 // loop_footer
      %s22 = sadd.s32 1, %s18
    $region7: #{enhanced_rag_forward.1} parent=1 // loop_footer_branch
      %17 = sbr.rel target = $region3
    $region8: #{enhanced_rag_forward.1} parent=1 // loop_exit
      _
    %1516 = vsyncpa [#allocation3], 1
    %s1517 = scalar_lea.sflag [#allocation3], 1
    %1518 = vsyncpa %s1517, 1

</llo_original>
